<compile_context>
chip_gen: v7x
topology: tpu7x:2x2x1
jax: 0.10.0
libtpu: 0.0.40
codegen_flags: <defaults>
</compile_context>

<pallas_src>
import functools

import jax
import jax.numpy as jnp
from jax import lax
from jax.experimental import pallas as pl
from jax.experimental.pallas import tpu as pltpu


# ----------------------------------------------------------------------------
# Kernel 1: StructAttention "pre" stage -> P (masked exp pairwise scores) and
#           L_var (Laplacian with row 0 replaced by the root score), per the
#           PyTorch source:  L_var[:, 0, :] = r_score[:, 0].exp()  (a scalar per
#           batch broadcast across the whole row - matched exactly here).
# ----------------------------------------------------------------------------
def struct_attn_pre_kernel(x_ref, wp_ref, bp_ref, wc_ref, bc_ref,
                           wb_ref, wr_ref, br_ref, p_ref, lvar_ref):
    Bt, N, D = x_ref.shape
    x3 = x_ref[...]                                   # (Bt, N, D) bf16
    xf = x3.reshape(Bt * N, D)                        # collapse batch into MXU M dim

    # Batch-independent projections on the collapsed slab (bf16 in, f32 out);
    # elementwise tanh/exp stay in f32 (v5e VPU/EUP have no bf16).
    enc_p = jnp.tanh(jnp.dot(xf, wp_ref[...],
                             preferred_element_type=jnp.float32) + bp_ref[...])
    enc_c = jnp.tanh(jnp.dot(xf, wc_ref[...],
                             preferred_element_type=jnp.float32) + bc_ref[...])
    tp = jnp.dot(enc_p.astype(jnp.bfloat16), wb_ref[...],
                 preferred_element_type=jnp.float32)  # tanh(enc_P) @ W_bil

    # pw[b,i,j] = tanh(enc_P[b,i]) @ W_bil @ tanh(enc_C[b,j])  -- last-axis
    # contraction on both operands, no materialised transpose.
    pw = jnp.einsum('bid,bjd->bij', tp.reshape(Bt, N, D),
                    enc_c.reshape(Bt, N, D),
                    preferred_element_type=jnp.float32)          # (Bt, N, N)

    # Root score: only node 0 is used (torch: r_score[:, 0].exp()).
    x0 = x3[:, 0, :]                                             # (Bt, D)
    r0 = jnp.dot(x0, wr_ref[...],
                 preferred_element_type=jnp.float32) + br_ref[...]   # (Bt, 1)
    er0 = jnp.exp(r0)

    ri = lax.broadcasted_iota(jnp.int32, (Bt, N, N), 1)
    ci = lax.broadcasted_iota(jnp.int32, (Bt, N, N), 2)
    eye = ri == ci
    # NOTE: parity with torch -- no max-subtraction before exp.
    P = jnp.where(eye, 0.0, jnp.exp(pw))                         # diag-masked weights
    colsum = jnp.sum(P, axis=1, keepdims=True)                   # P.sum(dim=1) (torch)
    L = jnp.where(eye, colsum, -P)                               # Laplacian

    p_ref[...] = P
    lvar_ref[...] = L
    # Row 0 overwritten via a ref slice (cheaper than a third full-tile select):
    # matches torch's broadcast of the single scalar exp(r_score[b, 0, 0]).
    lvar_ref[:, 0:1, :] = jnp.broadcast_to(er0.reshape(Bt, 1, 1), (Bt, 1, N))


# ----------------------------------------------------------------------------
# Kernel 2: adjacency A = mask_col0 * (P @ Linv) - mask_row0 * (P @ Linv^T)
#           (torch bmm semantics) fused with the dense-connected 2-layer GCN.
# ----------------------------------------------------------------------------
def attn_gcn_kernel(p_ref, linv_ref, x_ref, w1_ref, b1_ref,
                    w2c_ref, b2_ref, woc_ref, bo_ref, out_ref):
    Bt, N, _ = p_ref.shape
    D = x_ref.shape[2]
    O = woc_ref.shape[1]
    Opad = out_ref.shape[2]

    P = p_ref[...]                                               # (Bt, N, N) f32
    Linv = linv_ref[...]                                         # (Bt, N, N) f32
    PL = jnp.einsum('bik,bkj->bij', P, Linv, preferred_element_type=jnp.float32)
    PLt = jnp.einsum('bik,bjk->bij', P, Linv,                    # implicit transpose
                     preferred_element_type=jnp.float32)
    ri = lax.broadcasted_iota(jnp.int32, (Bt, N, N), 1)
    ci = lax.broadcasted_iota(jnp.int32, (Bt, N, N), 2)
    A = jnp.where(ci != 0, PL, 0.0) - jnp.where(ri != 0, PLt, 0.0)

    x3 = x_ref[...]                                              # (Bt, N, D) bf16
    xf = x3.reshape(Bt * N, D)

    # TODO(synk): DenseConnectedGCNs source was not provided; implementing a
    # canonical densely-connected 2-sublayer GCN (relu(A @ (cat(...) @ W))) with
    # a final linear projection over the concatenated features.
    h1 = jnp.maximum(
        jnp.einsum('bij,bjd->bid', A,
                   (jnp.dot(xf, w1_ref[...],
                            preferred_element_type=jnp.float32)
                    + b1_ref[...]).reshape(Bt, N, D),
                   preferred_element_type=jnp.float32), 0.0)     # (Bt, N, D)
    h1f = h1.reshape(Bt * N, D).astype(jnp.bfloat16)

    # Fused concat matmul: [x ; h1] @ [w2_x ; w2_h]  (K doubled, one MXU pass set).
    pre2 = (jnp.dot(jnp.concatenate([xf, h1f], axis=-1), w2c_ref[...],
                    preferred_element_type=jnp.float32) + b2_ref[...])
    h2 = jnp.maximum(
        jnp.einsum('bij,bjd->bid', A, pre2.reshape(Bt, N, D),
                   preferred_element_type=jnp.float32), 0.0)
    h2f = h2.reshape(Bt * N, D).astype(jnp.bfloat16)

    # Fused output projection: [x ; h1 ; h2] @ [wo_x ; wo_1 ; wo_2].
    out = (jnp.dot(jnp.concatenate([xf, h1f, h2f], axis=-1), woc_ref[...],
                   preferred_element_type=jnp.float32) + bo_ref[...])   # (Bt*N, O)

    if Opad > O:   # lane-dense (unmasked) store; wrapper slices the pad off
        out = jnp.concatenate(
            [out, jnp.zeros((Bt * N, Opad - O), jnp.float32)], axis=-1)
    out_ref[...] = out.reshape(Bt, N, Opad)


# ----------------------------------------------------------------------------
# Wrapper
# ----------------------------------------------------------------------------
def _wspec(arr):
    """Whole-array spec for loop-invariant weights: constant index map and
    single-buffered (no pointless double-buffering of tensors whose block index
    never changes -- frees VMEM headroom, esp. on v7x's 64 MiB)."""
    shape = arr.shape
    idx = lambda b: (0,) * len(shape)
    try:
        return pl.BlockSpec(shape, idx, pipeline_mode=pl.Buffered(1))
    except (AttributeError, TypeError):      # older jax without pipeline_mode
        return pl.BlockSpec(shape, idx)


def _pick_bt(B, N, target_rows):
    """Largest divisor of B with Bt*N <= target_rows (fill the MXU M dimension).
    Use target_rows=128 on v5e (4x128 MXU), 256 on v6e/v7x."""
    best = 1
    for bt in range(1, B + 1):
        if B % bt == 0 and bt * N <= max(target_rows, N):
            best = bt
    return best


def _xavier(key, shape):
    fan_in, fan_out = shape[-2], shape[-1]
    bound = (6.0 / (fan_in + fan_out)) ** 0.5
    return jax.random.uniform(key, shape, jnp.float32, -bound, bound)


def init_params(key, input_dim, output_dim):
    ks = jax.random.split(key, 10)
    D, O = input_dim, output_dim
    bf = jnp.bfloat16       # bf16 weight storage (item 5); biases stay f32
    return dict(
        # StructAttention (weights stored as (in, out), i.e. torch weight.T)
        w_p=_xavier(ks[0], (D, D)).astype(bf), b_p=jnp.zeros((1, D), jnp.float32),
        w_c=_xavier(ks[1], (D, D)).astype(bf), b_c=jnp.zeros((1, D), jnp.float32),
        w_bil=_xavier(ks[2], (D, D)).astype(bf),
        w_r=_xavier(ks[3], (D, 1)).astype(bf), b_r=jnp.zeros((1, 1), jnp.float32),
        # DCGCN (2 dense sublayers + output projection over concatenated feats)
        w1=_xavier(ks[4], (D, D)).astype(bf), b1=jnp.zeros((1, D), jnp.float32),
        w2_x=_xavier(ks[5], (D, D)).astype(bf), w2_h=_xavier(ks[6], (D, D)).astype(bf),
        b2=jnp.zeros((1, D), jnp.float32),
        wo_x=_xavier(ks[7], (D, O)).astype(bf), wo_1=_xavier(ks[8], (D, O)).astype(bf),
        wo_2=_xavier(ks[9], (D, O)).astype(bf),
        bo=jnp.zeros((1, O), jnp.float32),
    )


def reason_block(x, p, *, target_rows=256):
    B, N, D = x.shape
    O = p["wo_x"].shape[1]
    Bt = _pick_bt(B, N, target_rows)
    G = B // Bt
    Opad = max(128, ((O + 127) // 128) * 128)        # lane-dense output width

    xb = x.astype(jnp.bfloat16)                      # halve HBM->VMEM traffic
    # Pre-concatenated weights for the fused concat matmuls (free in XLA).
    w2_cat = jnp.concatenate([p["w2_x"], p["w2_h"]], axis=0)               # (2D, D)
    wo_cat = jnp.concatenate([p["wo_x"], p["wo_1"], p["wo_2"]], axis=0)    # (3D, O)

    bspec_x = pl.BlockSpec((Bt, N, D), lambda b: (b, 0, 0))
    bspec_nn = pl.BlockSpec((Bt, N, N), lambda b: (b, 0, 0))
    cparams = pltpu.CompilerParams(
        dimension_semantics=("parallel",),           # v7x: shard batch over 2 TCs
        vmem_limit_bytes=32 * 1024 * 1024)           # explicit, safe on v5e/v6e/v7x

    # --- stage 1: P and L_var -----------------------------------------------
    # (P / L_var keep their natural N-wide lane; padding N=8 -> 128 would blow up
    #  HBM writes 16x for a negligible store-tail win, and they feed linalg.inv.)
    P, L_var = pl.pallas_call(
        struct_attn_pre_kernel,
        out_shape=(jax.ShapeDtypeStruct((B, N, N), jnp.float32),
                   jax.ShapeDtypeStruct((B, N, N), jnp.float32)),
        grid=(G,),
        in_specs=[bspec_x,
                  _wspec(p["w_p"]), _wspec(p["b_p"]),
                  _wspec(p["w_c"]), _wspec(p["b_c"]),
                  _wspec(p["w_bil"]),
                  _wspec(p["w_r"]), _wspec(p["b_r"])],
        out_specs=(bspec_nn, bspec_nn),
        compiler_params=cparams,
    )(xb, p["w_p"], p["b_p"], p["w_c"], p["b_c"], p["w_bil"], p["w_r"], p["b_r"])

    # torch.pinverse == ordinary inverse for the root-augmented Laplacian, which
    # is nonsingular for positive edge/root weights (matrix-tree determinant > 0);
    # an LU inverse avoids the SVD cost of pinv.
    # TODO(synk): fall back to jnp.linalg.pinv if exact pseudo-inverse semantics
    # for singular L_var are ever required.
    L_inv = jnp.linalg.inv(L_var)

    # --- stage 2: adjacency A + DCGCN ---------------------------------------
    out_pad = pl.pallas_call(
        attn_gcn_kernel,
        out_shape=jax.ShapeDtypeStruct((B, N, Opad), jnp.float32),
        grid=(G,),
        in_specs=[bspec_nn, bspec_nn, bspec_x,
                  _wspec(p["w1"]), _wspec(p["b1"]),
                  _wspec(w2_cat), _wspec(p["b2"]),
                  _wspec(wo_cat), _wspec(p["bo"])],
        out_specs=pl.BlockSpec((Bt, N, Opad), lambda b: (b, 0, 0)),
        compiler_params=cparams,
    )(P, L_inv, xb, p["w1"], p["b1"], w2_cat, p["b2"], wo_cat, p["bo"])

    return out_pad[:, :, :O]


if __name__ == "__main__":
    B, N, D, O = 2, 8, 32, 32          # batch, node_num, bert_dim, output_dim
    key = jax.random.PRNGKey(0)
    k_x, k_p = jax.random.split(key)
    x = jax.random.normal(k_x, (B, N, D), jnp.float32)
    params = init_params(k_p, D, O)

    y = jax.jit(reason_block)(x, params)
    jax.block_until_ready(y)
    assert y.shape == (B, N, O)
    assert bool(jnp.all(jnp.isfinite(y)))
    print("KERNEL_OK")
</pallas_src>

<mosaic_0001>
module attributes {stable_mosaic.version = 11 : i64} {
  func.func @struct_attn_pre_kernel(%arg0: i32, %arg1: memref<2x8x32xbf16, #tpu.memory_space<vmem>>, %arg2: memref<32x32xbf16, #tpu.memory_space<vmem>>, %arg3: memref<1x32xf32, #tpu.memory_space<vmem>>, %arg4: memref<32x32xbf16, #tpu.memory_space<vmem>>, %arg5: memref<1x32xf32, #tpu.memory_space<vmem>>, %arg6: memref<32x32xbf16, #tpu.memory_space<vmem>>, %arg7: memref<32x1xbf16, #tpu.memory_space<vmem>>, %arg8: memref<1x1xf32, #tpu.memory_space<vmem>>, %arg9: memref<2x8x8xf32, #tpu.memory_space<vmem>>, %arg10: memref<2x8x8xf32, #tpu.memory_space<vmem>>) attributes {dimension_semantics = [#tpu.dimension_semantics<parallel>], iteration_bounds = array<i64: 1>, scalar_prefetch = 0 : i64, scratch_operands = 0 : i64, tpu.core_type = #tpu.core_type<tc>, window_params = [{transform_indices = @transform_0, window_bounds = array<i64: 2, 8, 32>}, {pipeline_mode = #tpu.pipeline_mode<synchronous>, transform_indices = @transform_1, window_bounds = array<i64: 32, 32>}, {pipeline_mode = #tpu.pipeline_mode<synchronous>, transform_indices = @transform_2, window_bounds = array<i64: 1, 32>}, {pipeline_mode = #tpu.pipeline_mode<synchronous>, transform_indices = @transform_3, window_bounds = array<i64: 32, 32>}, {pipeline_mode = #tpu.pipeline_mode<synchronous>, transform_indices = @transform_4, window_bounds = array<i64: 1, 32>}, {pipeline_mode = #tpu.pipeline_mode<synchronous>, transform_indices = @transform_5, window_bounds = array<i64: 32, 32>}, {pipeline_mode = #tpu.pipeline_mode<synchronous>, transform_indices = @transform_6, window_bounds = array<i64: 32, 1>}, {pipeline_mode = #tpu.pipeline_mode<synchronous>, transform_indices = @transform_7, window_bounds = array<i64: 1, 1>}, {transform_indices = @transform_8, window_bounds = array<i64: 2, 8, 8>}, {transform_indices = @transform_9, window_bounds = array<i64: 2, 8, 8>}]} {
    %c0 = arith.constant 0 : index
    %c0_0 = arith.constant 0 : index
    %c0_1 = arith.constant 0 : index
    %0 = vector.load %arg1[%c0, %c0_0, %c0_1] : memref<2x8x32xbf16, #tpu.memory_space<vmem>>, vector<2x8x32xbf16>
    %1 = vector.shape_cast %0 : vector<2x8x32xbf16> to vector<16x32xbf16>
    %c0_2 = arith.constant 0 : index
    %c0_3 = arith.constant 0 : index
    %2 = vector.load %arg2[%c0_2, %c0_3] : memref<32x32xbf16, #tpu.memory_space<vmem>>, vector<32x32xbf16>
    %cst = arith.constant dense<0.000000e+00> : vector<16x32xf32>
    %3 = tpu.matmul %1, %2, %cst {dimension_numbers = #tpu.dot_dimension_numbers<[1], [0], [0], [1], [0, 0, 1, 1], [], []>} : vector<16x32xbf16>, vector<32x32xbf16>, vector<16x32xf32> -> vector<16x32xf32>
    %c0_4 = arith.constant 0 : index
    %c0_5 = arith.constant 0 : index
    %4 = vector.load %arg3[%c0_4, %c0_5] : memref<1x32xf32, #tpu.memory_space<vmem>>, vector<1x32xf32>
    %5 = vector.broadcast %4 : vector<1x32xf32> to vector<16x32xf32>
    %6 = arith.addf %3, %5 : vector<16x32xf32>
    %7 = math.tanh %6 : vector<16x32xf32>
    %c0_6 = arith.constant 0 : index
    %c0_7 = arith.constant 0 : index
    %8 = vector.load %arg4[%c0_6, %c0_7] : memref<32x32xbf16, #tpu.memory_space<vmem>>, vector<32x32xbf16>
    %cst_8 = arith.constant dense<0.000000e+00> : vector<16x32xf32>
    %9 = tpu.matmul %1, %8, %cst_8 {dimension_numbers = #tpu.dot_dimension_numbers<[1], [0], [0], [1], [0, 0, 1, 1], [], []>} : vector<16x32xbf16>, vector<32x32xbf16>, vector<16x32xf32> -> vector<16x32xf32>
    %c0_9 = arith.constant 0 : index
    %c0_10 = arith.constant 0 : index
    %10 = vector.load %arg5[%c0_9, %c0_10] : memref<1x32xf32, #tpu.memory_space<vmem>>, vector<1x32xf32>
    %11 = vector.broadcast %10 : vector<1x32xf32> to vector<16x32xf32>
    %12 = arith.addf %9, %11 : vector<16x32xf32>
    %13 = math.tanh %12 : vector<16x32xf32>
    %14 = arith.truncf %7 : vector<16x32xf32> to vector<16x32xbf16>
    %c0_11 = arith.constant 0 : index
    %c0_12 = arith.constant 0 : index
    %15 = vector.load %arg6[%c0_11, %c0_12] : memref<32x32xbf16, #tpu.memory_space<vmem>>, vector<32x32xbf16>
    %cst_13 = arith.constant dense<0.000000e+00> : vector<16x32xf32>
    %16 = tpu.matmul %14, %15, %cst_13 {dimension_numbers = #tpu.dot_dimension_numbers<[1], [0], [0], [1], [0, 0, 1, 1], [], []>} : vector<16x32xbf16>, vector<32x32xbf16>, vector<16x32xf32> -> vector<16x32xf32>
    %17 = vector.shape_cast %16 : vector<16x32xf32> to vector<2x8x32xf32>
    %18 = vector.shape_cast %13 : vector<16x32xf32> to vector<2x8x32xf32>
    "tpu.trace_start"() <{level = 10 : i32, message = "bid,bjd->bij"}> : () -> ()
    %cst_14 = arith.constant dense<0.000000e+00> : vector<2x8x8xf32>
    %19 = tpu.matmul %17, %18, %cst_14 {dimension_numbers = #tpu.dot_dimension_numbers<[2], [2], [1], [1], [0, 0, 0, 1, 1, 1], [0], [0]>} : vector<2x8x32xf32>, vector<2x8x32xf32>, vector<2x8x8xf32> -> vector<2x8x8xf32>
    "tpu.trace_stop"() : () -> ()
    %20 = vector.extract_strided_slice %0 {offsets = [0, 0, 0], sizes = [2, 1, 32], strides = [1, 1, 1]} : vector<2x8x32xbf16> to vector<2x1x32xbf16>
    %21 = vector.shape_cast %20 : vector<2x1x32xbf16> to vector<2x32xbf16>
    %c0_15 = arith.constant 0 : index
    %c0_16 = arith.constant 0 : index
    %22 = vector.load %arg7[%c0_15, %c0_16] : memref<32x1xbf16, #tpu.memory_space<vmem>>, vector<32x1xbf16>
    %cst_17 = arith.constant dense<0.000000e+00> : vector<2x1xf32>
    %23 = tpu.matmul %21, %22, %cst_17 {dimension_numbers = #tpu.dot_dimension_numbers<[1], [0], [0], [1], [0, 0, 1, 1], [], []>} : vector<2x32xbf16>, vector<32x1xbf16>, vector<2x1xf32> -> vector<2x1xf32>
    %c0_18 = arith.constant 0 : index
    %c0_19 = arith.constant 0 : index
    %24 = vector.load %arg8[%c0_18, %c0_19] : memref<1x1xf32, #tpu.memory_space<vmem>>, vector<1x1xf32>
    %25 = vector.broadcast %24 : vector<1x1xf32> to vector<2x1xf32>
    %26 = arith.addf %23, %25 : vector<2x1xf32>
    %27 = math.exp %26 : vector<2x1xf32>
    %28 = tpu.iota {dimensions = array<i32: 1>} : vector<2x8x8xi32>
    %29 = tpu.iota {dimensions = array<i32: 2>} : vector<2x8x8xi32>
    %30 = arith.cmpi eq, %28, %29 : vector<2x8x8xi32>
    %31 = math.exp %19 : vector<2x8x8xf32>
    %cst_20 = arith.constant 0.000000e+00 : f32
    %32 = vector.broadcast %cst_20 : f32 to vector<2x8x8xf32>
    %33 = arith.select %30, %32, %31 : vector<2x8x8xi1>, vector<2x8x8xf32>
    %cst_21 = arith.constant dense<0.000000e+00> : vector<2x8xf32>
    %34 = vector.multi_reduction <add>, %33, %cst_21 [1] : vector<2x8x8xf32> to vector<2x8xf32>
    %35 = vector.shape_cast %34 : vector<2x8xf32> to vector<2x1x8xf32>
    %cst_22 = arith.constant 0.000000e+00 : f32
    %36 = vector.broadcast %cst_22 : f32 to vector<2x8x8xf32>
    %37 = arith.subf %36, %33 : vector<2x8x8xf32>
    %38 = vector.shape_cast %35 : vector<2x1x8xf32> to vector<2x1x8xf32>
    %39 = vector.broadcast %38 : vector<2x1x8xf32> to vector<2x8x8xf32>
    %40 = arith.select %30, %39, %37 : vector<2x8x8xi1>, vector<2x8x8xf32>
    %c0_23 = arith.constant 0 : index
    %c0_24 = arith.constant 0 : index
    %c0_25 = arith.constant 0 : index
    %41 = vector.load %arg9[%c0_23, %c0_24, %c0_25] : memref<2x8x8xf32, #tpu.memory_space<vmem>>, vector<2x8x8xf32>
    tpu.vector_store %arg9[%c0_23, %c0_24, %c0_25], %33 {strides = array<i32>} : memref<2x8x8xf32, #tpu.memory_space<vmem>>, vector<2x8x8xf32>,
    %c0_26 = arith.constant 0 : index
    %c0_27 = arith.constant 0 : index
    %c0_28 = arith.constant 0 : index
    %42 = vector.load %arg10[%c0_26, %c0_27, %c0_28] : memref<2x8x8xf32, #tpu.memory_space<vmem>>, vector<2x8x8xf32>
    tpu.vector_store %arg10[%c0_26, %c0_27, %c0_28], %40 {strides = array<i32>} : memref<2x8x8xf32, #tpu.memory_space<vmem>>, vector<2x8x8xf32>,
    %43 = vector.shape_cast %27 : vector<2x1xf32> to vector<2x1x1xf32>
    %44 = vector.shape_cast %43 : vector<2x1x1xf32> to vector<2x1x1xf32>
    %45 = vector.broadcast %44 : vector<2x1x1xf32> to vector<2x1x8xf32>
    %c0_29 = arith.constant 0 : index
    %c0_30 = arith.constant 0 : index
    %c0_31 = arith.constant 0 : index
    %46 = vector.load %arg10[%c0_29, %c0_30, %c0_31] : memref<2x8x8xf32, #tpu.memory_space<vmem>>, vector<2x1x8xf32>
    tpu.vector_store %arg10[%c0_29, %c0_30, %c0_31], %45 {strides = array<i32>} : memref<2x8x8xf32, #tpu.memory_space<vmem>>, vector<2x1x8xf32>,
    return
  }
  func.func @transform_0(%arg0: i32) -> (i32, i32, i32) {
    %c0_i32 = arith.constant 0 : i32
    %c0_i32_0 = arith.constant 0 : i32
    %c0_i32_1 = arith.constant 0 : i32
    return %arg0, %c0_i32, %c0_i32_0 : i32, i32, i32
  }
  func.func @transform_1(%arg0: i32) -> (i32, i32) {
    %c0_i32 = arith.constant 0 : i32
    %c0_i32_0 = arith.constant 0 : i32
    %c0_i32_1 = arith.constant 0 : i32
    return %c0_i32, %c0_i32_0 : i32, i32
  }
  func.func @transform_2(%arg0: i32) -> (i32, i32) {
    %c0_i32 = arith.constant 0 : i32
    %c0_i32_0 = arith.constant 0 : i32
    %c0_i32_1 = arith.constant 0 : i32
    return %c0_i32, %c0_i32_0 : i32, i32
  }
  func.func @transform_3(%arg0: i32) -> (i32, i32) {
    %c0_i32 = arith.constant 0 : i32
    %c0_i32_0 = arith.constant 0 : i32
    %c0_i32_1 = arith.constant 0 : i32
    return %c0_i32, %c0_i32_0 : i32, i32
  }
  func.func @transform_4(%arg0: i32) -> (i32, i32) {
    %c0_i32 = arith.constant 0 : i32
    %c0_i32_0 = arith.constant 0 : i32
    %c0_i32_1 = arith.constant 0 : i32
    return %c0_i32, %c0_i32_0 : i32, i32
  }
  func.func @transform_5(%arg0: i32) -> (i32, i32) {
    %c0_i32 = arith.constant 0 : i32
    %c0_i32_0 = arith.constant 0 : i32
    %c0_i32_1 = arith.constant 0 : i32
    return %c0_i32, %c0_i32_0 : i32, i32
  }
  func.func @transform_6(%arg0: i32) -> (i32, i32) {
    %c0_i32 = arith.constant 0 : i32
    %c0_i32_0 = arith.constant 0 : i32
    %c0_i32_1 = arith.constant 0 : i32
    return %c0_i32, %c0_i32_0 : i32, i32
  }
  func.func @transform_7(%arg0: i32) -> (i32, i32) {
    %c0_i32 = arith.constant 0 : i32
    %c0_i32_0 = arith.constant 0 : i32
    %c0_i32_1 = arith.constant 0 : i32
    return %c0_i32, %c0_i32_0 : i32, i32
  }
  func.func @transform_8(%arg0: i32) -> (i32, i32, i32) {
    %c0_i32 = arith.constant 0 : i32
    %c0_i32_0 = arith.constant 0 : i32
    %c0_i32_1 = arith.constant 0 : i32
    return %arg0, %c0_i32, %c0_i32_0 : i32, i32, i32
  }
  func.func @transform_9(%arg0: i32) -> (i32, i32, i32) {
    %c0_i32 = arith.constant 0 : i32
    %c0_i32_0 = arith.constant 0 : i32
    %c0_i32_1 = arith.constant 0 : i32
    return %arg0, %c0_i32, %c0_i32_0 : i32, i32, i32
  }
}

module attributes {stable_mosaic.version = 11 : i64} {
  func.func @attn_gcn_kernel(%arg0: i32, %arg1: memref<2x8x8xf32, #tpu.memory_space<vmem>>, %arg2: memref<2x8x8xf32, #tpu.memory_space<vmem>>, %arg3: memref<2x8x32xbf16, #tpu.memory_space<vmem>>, %arg4: memref<32x32xbf16, #tpu.memory_space<vmem>>, %arg5: memref<1x32xf32, #tpu.memory_space<vmem>>, %arg6: memref<64x32xbf16, #tpu.memory_space<vmem>>, %arg7: memref<1x32xf32, #tpu.memory_space<vmem>>, %arg8: memref<96x32xbf16, #tpu.memory_space<vmem>>, %arg9: memref<1x32xf32, #tpu.memory_space<vmem>>, %arg10: memref<2x8x128xf32, #tpu.memory_space<vmem>>) attributes {dimension_semantics = [#tpu.dimension_semantics<parallel>], iteration_bounds = array<i64: 1>, scalar_prefetch = 0 : i64, scratch_operands = 0 : i64, tpu.core_type = #tpu.core_type<tc>, window_params = [{transform_indices = @transform_0, window_bounds = array<i64: 2, 8, 8>}, {transform_indices = @transform_1, window_bounds = array<i64: 2, 8, 8>}, {transform_indices = @transform_2, window_bounds = array<i64: 2, 8, 32>}, {pipeline_mode = #tpu.pipeline_mode<synchronous>, transform_indices = @transform_3, window_bounds = array<i64: 32, 32>}, {pipeline_mode = #tpu.pipeline_mode<synchronous>, transform_indices = @transform_4, window_bounds = array<i64: 1, 32>}, {pipeline_mode = #tpu.pipeline_mode<synchronous>, transform_indices = @transform_5, window_bounds = array<i64: 64, 32>}, {pipeline_mode = #tpu.pipeline_mode<synchronous>, transform_indices = @transform_6, window_bounds = array<i64: 1, 32>}, {pipeline_mode = #tpu.pipeline_mode<synchronous>, transform_indices = @transform_7, window_bounds = array<i64: 96, 32>}, {pipeline_mode = #tpu.pipeline_mode<synchronous>, transform_indices = @transform_8, window_bounds = array<i64: 1, 32>}, {transform_indices = @transform_9, window_bounds = array<i64: 2, 8, 128>}]} {
    %c0 = arith.constant 0 : index
    %c0_0 = arith.constant 0 : index
    %c0_1 = arith.constant 0 : index
    %0 = vector.load %arg1[%c0, %c0_0, %c0_1] : memref<2x8x8xf32, #tpu.memory_space<vmem>>, vector<2x8x8xf32>
    %c0_2 = arith.constant 0 : index
    %c0_3 = arith.constant 0 : index
    %c0_4 = arith.constant 0 : index
    %1 = vector.load %arg2[%c0_2, %c0_3, %c0_4] : memref<2x8x8xf32, #tpu.memory_space<vmem>>, vector<2x8x8xf32>
    "tpu.trace_start"() <{level = 10 : i32, message = "bik,bkj->bij"}> : () -> ()
    %cst = arith.constant dense<0.000000e+00> : vector<2x8x8xf32>
    %2 = tpu.matmul %0, %1, %cst {dimension_numbers = #tpu.dot_dimension_numbers<[2], [1], [1], [2], [0, 0, 0, 1, 1, 2], [0], [0]>} : vector<2x8x8xf32>, vector<2x8x8xf32>, vector<2x8x8xf32> -> vector<2x8x8xf32>
    "tpu.trace_stop"() : () -> ()
    "tpu.trace_start"() <{level = 10 : i32, message = "bik,bjk->bij"}> : () -> ()
    %cst_5 = arith.constant dense<0.000000e+00> : vector<2x8x8xf32>
    %3 = tpu.matmul %0, %1, %cst_5 {dimension_numbers = #tpu.dot_dimension_numbers<[2], [2], [1], [1], [0, 0, 0, 1, 1, 1], [0], [0]>} : vector<2x8x8xf32>, vector<2x8x8xf32>, vector<2x8x8xf32> -> vector<2x8x8xf32>
    "tpu.trace_stop"() : () -> ()
    %4 = tpu.iota {dimensions = array<i32: 1>} : vector<2x8x8xi32>
    %5 = tpu.iota {dimensions = array<i32: 2>} : vector<2x8x8xi32>
    %c0_i32 = arith.constant 0 : i32
    %6 = vector.broadcast %c0_i32 : i32 to vector<2x8x8xi32>
    %7 = arith.cmpi ne, %5, %6 : vector<2x8x8xi32>
    %cst_6 = arith.constant 0.000000e+00 : f32
    %8 = vector.broadcast %cst_6 : f32 to vector<2x8x8xf32>
    %9 = arith.select %7, %2, %8 : vector<2x8x8xi1>, vector<2x8x8xf32>
    %c0_i32_7 = arith.constant 0 : i32
    %10 = vector.broadcast %c0_i32_7 : i32 to vector<2x8x8xi32>
    %11 = arith.cmpi ne, %4, %10 : vector<2x8x8xi32>
    %cst_8 = arith.constant 0.000000e+00 : f32
    %12 = vector.broadcast %cst_8 : f32 to vector<2x8x8xf32>
    %13 = arith.select %11, %3, %12 : vector<2x8x8xi1>, vector<2x8x8xf32>
    %14 = arith.subf %9, %13 : vector<2x8x8xf32>
    %c0_9 = arith.constant 0 : index
    %c0_10 = arith.constant 0 : index
    %c0_11 = arith.constant 0 : index
    %15 = vector.load %arg3[%c0_9, %c0_10, %c0_11] : memref<2x8x32xbf16, #tpu.memory_space<vmem>>, vector<2x8x32xbf16>
    %16 = vector.shape_cast %15 : vector<2x8x32xbf16> to vector<16x32xbf16>
    %c0_12 = arith.constant 0 : index
    %c0_13 = arith.constant 0 : index
    %17 = vector.load %arg4[%c0_12, %c0_13] : memref<32x32xbf16, #tpu.memory_space<vmem>>, vector<32x32xbf16>
    %cst_14 = arith.constant dense<0.000000e+00> : vector<16x32xf32>
    %18 = tpu.matmul %16, %17, %cst_14 {dimension_numbers = #tpu.dot_dimension_numbers<[1], [0], [0], [1], [0, 0, 1, 1], [], []>} : vector<16x32xbf16>, vector<32x32xbf16>, vector<16x32xf32> -> vector<16x32xf32>
    %c0_15 = arith.constant 0 : index
    %c0_16 = arith.constant 0 : index
    %19 = vector.load %arg5[%c0_15, %c0_16] : memref<1x32xf32, #tpu.memory_space<vmem>>, vector<1x32xf32>
    %20 = vector.broadcast %19 : vector<1x32xf32> to vector<16x32xf32>
    %21 = arith.addf %18, %20 : vector<16x32xf32>
    %22 = vector.shape_cast %21 : vector<16x32xf32> to vector<2x8x32xf32>
    "tpu.trace_start"() <{level = 10 : i32, message = "bij,bjd->bid"}> : () -> ()
    %cst_17 = arith.constant dense<0.000000e+00> : vector<2x8x32xf32>
    %23 = tpu.matmul %14, %22, %cst_17 {dimension_numbers = #tpu.dot_dimension_numbers<[2], [1], [1], [2], [0, 0, 0, 1, 1, 2], [0], [0]>} : vector<2x8x8xf32>, vector<2x8x32xf32>, vector<2x8x32xf32> -> vector<2x8x32xf32>
    "tpu.trace_stop"() : () -> ()
    %cst_18 = arith.constant 0.000000e+00 : f32
    %24 = vector.broadcast %cst_18 : f32 to vector<2x8x32xf32>
    %25 = arith.maximumf %23, %24 : vector<2x8x32xf32>
    %26 = vector.shape_cast %25 : vector<2x8x32xf32> to vector<16x32xf32>
    %27 = arith.truncf %26 : vector<16x32xf32> to vector<16x32xbf16>
    %28 = tpu.concatenate %16, %27 in 1 : vector<16x32xbf16>, vector<16x32xbf16> -> vector<16x64xbf16>
    %c0_19 = arith.constant 0 : index
    %c0_20 = arith.constant 0 : index
    %29 = vector.load %arg6[%c0_19, %c0_20] : memref<64x32xbf16, #tpu.memory_space<vmem>>, vector<64x32xbf16>
    %cst_21 = arith.constant dense<0.000000e+00> : vector<16x32xf32>
    %30 = tpu.matmul %28, %29, %cst_21 {dimension_numbers = #tpu.dot_dimension_numbers<[1], [0], [0], [1], [0, 0, 1, 1], [], []>} : vector<16x64xbf16>, vector<64x32xbf16>, vector<16x32xf32> -> vector<16x32xf32>
    %c0_22 = arith.constant 0 : index
    %c0_23 = arith.constant 0 : index
    %31 = vector.load %arg7[%c0_22, %c0_23] : memref<1x32xf32, #tpu.memory_space<vmem>>, vector<1x32xf32>
    %32 = vector.broadcast %31 : vector<1x32xf32> to vector<16x32xf32>
    %33 = arith.addf %30, %32 : vector<16x32xf32>
    %34 = vector.shape_cast %33 : vector<16x32xf32> to vector<2x8x32xf32>
    "tpu.trace_start"() <{level = 10 : i32, message = "bij,bjd->bid"}> : () -> ()
    %cst_24 = arith.constant dense<0.000000e+00> : vector<2x8x32xf32>
    %35 = tpu.matmul %14, %34, %cst_24 {dimension_numbers = #tpu.dot_dimension_numbers<[2], [1], [1], [2], [0, 0, 0, 1, 1, 2], [0], [0]>} : vector<2x8x8xf32>, vector<2x8x32xf32>, vector<2x8x32xf32> -> vector<2x8x32xf32>
    "tpu.trace_stop"() : () -> ()
    %cst_25 = arith.constant 0.000000e+00 : f32
    %36 = vector.broadcast %cst_25 : f32 to vector<2x8x32xf32>
    %37 = arith.maximumf %35, %36 : vector<2x8x32xf32>
    %38 = vector.shape_cast %37 : vector<2x8x32xf32> to vector<16x32xf32>
    %39 = arith.truncf %38 : vector<16x32xf32> to vector<16x32xbf16>
    %40 = tpu.concatenate %16, %27, %39 in 1 : vector<16x32xbf16>, vector<16x32xbf16>, vector<16x32xbf16> -> vector<16x96xbf16>
    %c0_26 = arith.constant 0 : index
    %c0_27 = arith.constant 0 : index
    %41 = vector.load %arg8[%c0_26, %c0_27] : memref<96x32xbf16, #tpu.memory_space<vmem>>, vector<96x32xbf16>
    %cst_28 = arith.constant dense<0.000000e+00> : vector<16x32xf32>
    %42 = tpu.matmul %40, %41, %cst_28 {dimension_numbers = #tpu.dot_dimension_numbers<[1], [0], [0], [1], [0, 0, 1, 1], [], []>} : vector<16x96xbf16>, vector<96x32xbf16>, vector<16x32xf32> -> vector<16x32xf32>
    %c0_29 = arith.constant 0 : index
    %c0_30 = arith.constant 0 : index
    %43 = vector.load %arg9[%c0_29, %c0_30] : memref<1x32xf32, #tpu.memory_space<vmem>>, vector<1x32xf32>
    %44 = vector.broadcast %43 : vector<1x32xf32> to vector<16x32xf32>
    %45 = arith.addf %42, %44 : vector<16x32xf32>
    %cst_31 = arith.constant 0.000000e+00 : f32
    %46 = vector.broadcast %cst_31 : f32 to vector<16x96xf32>
    %47 = tpu.concatenate %45, %46 in 1 : vector<16x32xf32>, vector<16x96xf32> -> vector<16x128xf32>
    %48 = vector.shape_cast %47 : vector<16x128xf32> to vector<2x8x128xf32>
    %c0_32 = arith.constant 0 : index
    %c0_33 = arith.constant 0 : index
    %c0_34 = arith.constant 0 : index
    %49 = vector.load %arg10[%c0_32, %c0_33, %c0_34] : memref<2x8x128xf32, #tpu.memory_space<vmem>>, vector<2x8x128xf32>
    tpu.vector_store %arg10[%c0_32, %c0_33, %c0_34], %48 {strides = array<i32>} : memref<2x8x128xf32, #tpu.memory_space<vmem>>, vector<2x8x128xf32>,
    return
  }
  func.func @transform_0(%arg0: i32) -> (i32, i32, i32) {
    %c0_i32 = arith.constant 0 : i32
    %c0_i32_0 = arith.constant 0 : i32
    %c0_i32_1 = arith.constant 0 : i32
    return %arg0, %c0_i32, %c0_i32_0 : i32, i32, i32
  }
  func.func @transform_1(%arg0: i32) -> (i32, i32, i32) {
    %c0_i32 = arith.constant 0 : i32
    %c0_i32_0 = arith.constant 0 : i32
    %c0_i32_1 = arith.constant 0 : i32
    return %arg0, %c0_i32, %c0_i32_0 : i32, i32, i32
  }
  func.func @transform_2(%arg0: i32) -> (i32, i32, i32) {
    %c0_i32 = arith.constant 0 : i32
    %c0_i32_0 = arith.constant 0 : i32
    %c0_i32_1 = arith.constant 0 : i32
    return %arg0, %c0_i32, %c0_i32_0 : i32, i32, i32
  }
  func.func @transform_3(%arg0: i32) -> (i32, i32) {
    %c0_i32 = arith.constant 0 : i32
    %c0_i32_0 = arith.constant 0 : i32
    %c0_i32_1 = arith.constant 0 : i32
    return %c0_i32, %c0_i32_0 : i32, i32
  }
  func.func @transform_4(%arg0: i32) -> (i32, i32) {
    %c0_i32 = arith.constant 0 : i32
    %c0_i32_0 = arith.constant 0 : i32
    %c0_i32_1 = arith.constant 0 : i32
    return %c0_i32, %c0_i32_0 : i32, i32
  }
  func.func @transform_5(%arg0: i32) -> (i32, i32) {
    %c0_i32 = arith.constant 0 : i32
    %c0_i32_0 = arith.constant 0 : i32
    %c0_i32_1 = arith.constant 0 : i32
    return %c0_i32, %c0_i32_0 : i32, i32
  }
  func.func @transform_6(%arg0: i32) -> (i32, i32) {
    %c0_i32 = arith.constant 0 : i32
    %c0_i32_0 = arith.constant 0 : i32
    %c0_i32_1 = arith.constant 0 : i32
    return %c0_i32, %c0_i32_0 : i32, i32
  }
  func.func @transform_7(%arg0: i32) -> (i32, i32) {
    %c0_i32 = arith.constant 0 : i32
    %c0_i32_0 = arith.constant 0 : i32
    %c0_i32_1 = arith.constant 0 : i32
    return %c0_i32, %c0_i32_0 : i32, i32
  }
  func.func @transform_8(%arg0: i32) -> (i32, i32) {
    %c0_i32 = arith.constant 0 : i32
    %c0_i32_0 = arith.constant 0 : i32
    %c0_i32_1 = arith.constant 0 : i32
    return %c0_i32, %c0_i32_0 : i32, i32
  }
  func.func @transform_9(%arg0: i32) -> (i32, i32, i32) {
    %c0_i32 = arith.constant 0 : i32
    %c0_i32_0 = arith.constant 0 : i32
    %c0_i32_1 = arith.constant 0 : i32
    return %arg0, %c0_i32, %c0_i32_0 : i32, i32, i32
  }
}

</mosaic_0001>

<llo_original>
// kernel: custom-call.11
$region0: #{custom-call.11}
  %s0 = inlined_call_operand.vmem [shape: f32[2,8,8], index: 0, kind: input, shape index: {}]
  %s1 = inlined_call_operand.vmem [shape: f32[2,8,8], index: 1, kind: output, shape index: {0}]
  %s2 = inlined_call_operand.hbm [shape: s32[2,8], index: 2, kind: output, shape index: {1}]
  %s3 = inlined_call_operand.vmem [shape: s32[2,8], index: 3, kind: output, shape index: {2}]
  %4 = xla_tuple %s1, %s2, %s3
  $region1: #{custom-call.11} parent=0
    #allocation0 [shape = 'u8[8192]{0}', space=vmem, size = 0x2000, scoped, tag = 'operand span for operand 0']
    #allocation1 [shape = 'u8[8192]{0}', space=vmem, size = 0x2000, scoped, tag = 'operand span for operand 1']
    #allocation2 [shape = 'u8[4096]{0}', space=vmem, size = 0x1000, scoped, tag = 'operand span for operand 2']
    #allocation3 [shape = 'u8[2048]{0}', space=vmem, size = 0x800, scoped, tag = 'packed  for operand 2']
    #allocation4 [shape = 's32[2]{0}', space=sflag, size = 0x8, scoped, tag = 'scoped memory for custom-call.11']
    #allocation5 [shape = 'u8[4096]{0}', space=vmem, size = 0x1000, scoped, tag = 'operand span for operand 3']
    #allocation6 [shape = 'u8[2048]{0}', space=vmem, size = 0x800, scoped, tag = 'packed  for operand 3']
    %5 = vsyncpa [#allocation4], 0
    %s6 = scalar_lea.sflag [#allocation4], 1
    %7 = vsyncpa %s6, 0
    loop: start=0, step=1, limit=4
    $region2: #{custom-call.11} parent=1 // loop_pre_header
      _
    $region3: #{custom-call.11} parent=1 // loop_header
      %s9 = sphi 0, %s13
      %p10 = scmp.ge.s32.totalorder %s9, 4
      %s21 = sphi 0, %s23
      %s24 = sphi 0, %s21
      %s25 = sphi 0, %s24
      %s41 = sphi 0, %s25
      %s49 = sphi 0, %s51
      %s52 = sphi 0, %s49
      %s53 = sphi 0, %s52
      %s69 = sphi 0, %s53
    $region4: #{custom-call.11} parent=1 // loop_header_branch
      %12 = sbr.rel (%p10) target = $region8
    $region5: #{custom-call.11} parent=1 // loop_body
      %s14 = ssub.s32 %s9, 1
      %s15 = ssub.s32 %s9, 2
      %s16 = sadd.s32 %s9, 1
      %s17 = sshrl.u32 %s9, 3
      %s18 = sshrl.u32 %s16, 3
      %s19 = ssub.s32 %s17, %s18
      %p20 = scmp.eq.s32.totalorder %s19, 0
      %s22 = sadd.s32 %s21, 1
      %s23 = scalar_select %p20, %s21, %s22
      %p26 = pneg %p20
      %p27 = scmp.eq.s32.totalorder %s9, 1
      %p28 = por %p26, %p27
      %p29 = scmp.ne.s32.totalorder %s21, %s24
      %p30 = scmp.eq.s32.totalorder %s9, 0
      %p31 = por %p29, %p30
      %p32 = scmp.ne.s32.totalorder %s21, %s24
      %p33 = scmp.eq.s32.totalorder %s14, 1
      %p34 = por %p32, %p33
      %p35 = scmp.ne.s32.totalorder %s24, %s25
      %p36 = scmp.eq.s32.totalorder %s14, 0
      %p37 = por %p35, %p36
      %p38 = scmp.ne.s32.totalorder %s24, %s25
      %p39 = scmp.eq.s32.totalorder %s15, 1
      %p40 = por %p38, %p39
      %p42 = scmp.ne.s32.totalorder %s25, %s41
      %p43 = scmp.eq.s32.totalorder %s15, 0
      %p44 = por %p42, %p43
      %s45 = sshrl.u32 %s9, 3
      %s46 = sshrl.u32 %s16, 3
      %s47 = ssub.s32 %s45, %s46
      %p48 = scmp.eq.s32.totalorder %s47, 0
      %s50 = sadd.s32 %s49, 1
      %s51 = scalar_select %p48, %s49, %s50
      %p54 = pneg %p48
      %p55 = scmp.eq.s32.totalorder %s9, 1
      %p56 = por %p54, %p55
      %p57 = scmp.ne.s32.totalorder %s49, %s52
      %p58 = scmp.eq.s32.totalorder %s9, 0
      %p59 = por %p57, %p58
      %p60 = scmp.ne.s32.totalorder %s49, %s52
      %p61 = scmp.eq.s32.totalorder %s14, 1
      %p62 = por %p60, %p61
      %p63 = scmp.ne.s32.totalorder %s52, %s53
      %p64 = scmp.eq.s32.totalorder %s14, 0
      %p65 = por %p63, %p64
      %p66 = scmp.ne.s32.totalorder %s52, %s53
      %p67 = scmp.eq.s32.totalorder %s15, 1
      %p68 = por %p66, %p67
      %p70 = scmp.ne.s32.totalorder %s53, %s69
      %p71 = scmp.eq.s32.totalorder %s15, 0
      %p72 = por %p70, %p71
      %p73 = scmp.le.s32.totalorder 1, %s9
      %p74 = scmp.lt.s32.totalorder %s9, 3
      %p75 = pnand %p73, %p74
      %p76 = pneg %p75
      // Predicated region
      $region9: #{custom-call.11} parent=5 // pred_check
        _
      $region10: #{custom-call.11} parent=5 // pred_check_branch
        %78 = sbr.rel (%p75) target = $region12
      $region11: #{custom-call.11} parent=5 // pred_region
        %s79 = ssub.s32 %s9, 1
      $region12: #{custom-call.11} parent=5 // pred_fallthru
        _
      %p80 = scmp.lt.s32.totalorder %s9, 2
      // Predicated region
      $region13: #{custom-call.11} parent=5 // pred_check
        %p81 = pneg %p80
      $region14: #{custom-call.11} parent=5 // pred_check_branch
        %83 = sbr.rel (%p81) target = $region16
      $region15: #{custom-call.11} parent=5 // pred_region
        %s84 = sand.u32 %s9, 1
        %s85 = sand.u32 %s9, 1
        %s86 = smul.addr %s85, 8
        %s87 = scalar_lea.vmem [#allocation0], %s86
        %s88 = smul.addr %s9, 8
        %s89 = scalar_lea.vmem %s0, %s88
        // Predicated region
        $region17: #{custom-call.11} parent=15 // pred_check
          _
        $region18: #{custom-call.11} parent=15 // pred_check_branch
          %91 = sbr.rel (0) target = $region20
        $region19: #{custom-call.11} parent=15 // pred_region
          // Predicated region
          $region21: #{custom-call.11} parent=19 // pred_check
            _
          $region22: #{custom-call.11} parent=19 // pred_check_branch
            %93 = sbr.rel (0) target = $region24
          $region23: #{custom-call.11} parent=19 // pred_region
            // Predicated region
            $region36: #{custom-call.11} parent=23 // pred_check
              _
            $region37: #{custom-call.11} parent=23 // pred_check_branch
              %108 = sbr.rel (0) target = $region39
            $region38: #{custom-call.11} parent=23 // pred_region
              loop: start=0, step=1, limit=1
              $region40: #{custom-call.11} parent=38 // loop_pre_header
                _
              $region41: #{custom-call.11} parent=38 // loop_header
                %s110 = sphi 0, %s114
                %p111 = scmp.ge.s32.totalorder %s110, 1
                %s115 = sphi %s89, %s89
                %s116 = sphi %s87, %s87
              $region42: #{custom-call.11} parent=38 // loop_header_branch
                %113 = sbr.rel (%p111) target = $region46
              $region43: #{custom-call.11} parent=38 // loop_body
                %v117 = vld [vmem:[%s115] sm:$0xff]
                %118 = vst [vmem:[%s116] sm:$0xff] %v117
              $region44: #{custom-call.11} parent=38 // loop_footer
                %s114 = sadd.s32 1, %s110
              $region45: #{custom-call.11} parent=38 // loop_footer_branch
                %109 = sbr.rel target = $region41
              $region46: #{custom-call.11} parent=38 // loop_exit
                _
            $region39: #{custom-call.11} parent=23 // pred_fallthru
              _
            // Predicated region
            $region47: #{custom-call.11} parent=23 // pred_check
              _
            $region48: #{custom-call.11} parent=23 // pred_check_branch
              %120 = sbr.rel target = $region50
            $region49: #{custom-call.11} parent=23 // pred_region
              _
            $region50: #{custom-call.11} parent=23 // pred_fallthru
              _
          $region24: #{custom-call.11} parent=19 // pred_fallthru
            _
          // Predicated region
          $region25: #{custom-call.11} parent=19 // pred_check
            _
          $region26: #{custom-call.11} parent=19 // pred_check_branch
            %95 = sbr.rel target = $region28
          $region27: #{custom-call.11} parent=19 // pred_region
            loop: start=0, step=1, limit=1
            $region29: #{custom-call.11} parent=27 // loop_pre_header
              _
            $region30: #{custom-call.11} parent=27 // loop_header
              %s98 = sphi 0, %s102
              %p99 = scmp.ge.s32.totalorder %s98, 1
              %s103 = sphi %s89, %s89
              %s104 = sphi %s87, %s87
            $region31: #{custom-call.11} parent=27 // loop_header_branch
              %101 = sbr.rel (%p99) target = $region35
            $region32: #{custom-call.11} parent=27 // loop_body
              %v105 = vld [vmem:[%s103] sm:$0xff]
              %106 = vst [vmem:[%s104] sm:$0xff] %v105
            $region33: #{custom-call.11} parent=27 // loop_footer
              %s102 = sadd.s32 1, %s98
            $region34: #{custom-call.11} parent=27 // loop_footer_branch
              %97 = sbr.rel target = $region30
            $region35: #{custom-call.11} parent=27 // loop_exit
              _
          $region28: #{custom-call.11} parent=19 // pred_fallthru
            _
        $region20: #{custom-call.11} parent=15 // pred_fallthru
          _
        %121 = vnop
      $region16: #{custom-call.11} parent=5 // pred_fallthru
        _
      %p122 = scmp.le.s32.totalorder 1, %s9
      %p123 = scmp.lt.s32.totalorder %s9, 3
      %p124 = pnand %p122, %p123
      %p125 = pneg %p124
      // Predicated region
      $region51: #{custom-call.11} parent=5 // pred_check
        _
      $region52: #{custom-call.11} parent=5 // pred_check_branch
        %127 = sbr.rel (%p124) target = $region54
      $region53: #{custom-call.11} parent=5 // pred_region
        #allocation7 [shape = 's32[8,128]{1,0}', space=vmem, size = 0x1000, scoped, tag = 'scratch for permutations']
        %s128 = ssub.s32 %s9, 1
        %s129 = sand.u32 %s14, 1
        %s130 = sand.u32 %s14, 1
        %s131 = smul.addr %s130, 8
        %s132 = scalar_lea.vmem [#allocation0], %s131
        %s133 = sand.u32 %s14, 1
        %s134 = sand.u32 %s14, 1
        %s135 = smul.addr %s134, 8
        %s136 = scalar_lea.vmem [#allocation0], %s135
        %s137 = sand.u32 %s14, 1
        %s138 = sand.u32 %s14, 1
        %s139 = smul.addr %s138, 8
        %s140 = scalar_lea.vmem [#allocation1], %s139
        %p141 = pneg %p37
        %p142 = pneg %p34
        %s143 = sand.u32 %s24, 1
        %s144 = scalar_lea.sflag [#allocation4], %s143
        %s145 = sand.u32 %s24, 1
        %s146 = smul.addr %s145, 2
        %s147 = scalar_lea.vmem [#allocation3], %s146
        %p148 = pneg %p65
        %p149 = pneg %p62
        %s150 = sand.u32 %s52, 1
        %s151 = sand.u32 %s52, 1
        %s152 = smul.addr %s151, 2
        %s153 = scalar_lea.vmem [#allocation6], %s152
        %s154 = sshrl.u32 %s14, 3
        %s155 = sshrl.u32 %s14, 3
        %v156 = vld [vmem:[%s132] sm:$0xff]
        %157 = vst [vmem:[%s140] sm:$0xff] %v156
        %s158 = sand.u32 %s14, 7
        %s159 = scalar_lea.vmem [#allocation2], %s158
        %s160 = sand.u32 %s14, 7
        %s161 = scalar_lea.vmem [#allocation5], %s160
        %162 = vst [vmem:[%s159] sm:$0x1] 0
        %v163 = vlaneseq
        %v164 = vshrl.u32 %v163, 7
        %v165 = vmov %v164
        %167 = vst [vmem:[#allocation7] sm:$0xff] %v165
        loop: start=0, step=1, limit=8
        $region56: #{custom-call.11} parent=53 // loop_pre_header
          _
        $region57: #{custom-call.11} parent=53 // loop_header
          %s169 = sphi 0, %s173
          %p170 = scmp.ge.s32.totalorder %s169, 8
        $region58: #{custom-call.11} parent=53 // loop_header_branch
          %172 = sbr.rel (%p170) target = $region62
        $region59: #{custom-call.11} parent=53 // loop_body
          %v174 = vstv %s169
          %v175 = vlaneseq
          %v176 = vshrl.u32 %v175, 7
          %v177 = vmov %v176
          %v178 = vld [vmem:[%s140] sm:$0xff]
          %v179 = vand.u32 2147483647, %v178
          %v181 = vstv %s169
          %vm182 = vcmp.ge.s32.totalorder %v177, %v181
          %vm183 = vcmp.lt.s32.totalorder %v177, 8
          %vm184 = vmand %vm182, %vm183
          %vm185 = vcmp.lt.f32.partialorder -inf, %v179
          %vm186 = vmand %vm184, %vm185
          %v187 = vsel %vm186, %v177, %v174
          %v188 = vsel %vm186, %v179, -inf
          %v189 = vrot.slane %v188, 1
          %v190 = vrot.slane %v187, 1
          %vm191 = vcmp.ge.f32.partialorder %v189, %v188
          %v192 = vsel %vm191, %v189, %v188
          %v193 = vsel %vm191, %v190, %v187
          %v194 = vrot.slane %v189, 1
          %v195 = vrot.slane %v190, 1
          %vm196 = vcmp.ge.f32.partialorder %v194, %v192
          %v197 = vsel %vm196, %v194, %v192
          %v198 = vsel %vm196, %v195, %v193
          %v199 = vrot.slane %v194, 1
          %v200 = vrot.slane %v195, 1
          %vm201 = vcmp.ge.f32.partialorder %v199, %v197
          %v202 = vsel %vm201, %v199, %v197
          %v203 = vsel %vm201, %v200, %v198
          %v204 = vrot.slane %v199, 1
          %v205 = vrot.slane %v200, 1
          %vm206 = vcmp.ge.f32.partialorder %v204, %v202
          %v207 = vsel %vm206, %v204, %v202
          %v208 = vsel %vm206, %v205, %v203
          %v209 = vrot.slane %v204, 1
          %v210 = vrot.slane %v205, 1
          %vm211 = vcmp.ge.f32.partialorder %v209, %v207
          %v212 = vsel %vm211, %v209, %v207
          %v213 = vsel %vm211, %v210, %v208
          %v214 = vrot.slane %v209, 1
          %v215 = vrot.slane %v210, 1
          %vm216 = vcmp.ge.f32.partialorder %v214, %v212
          %v217 = vsel %vm216, %v214, %v212
          %v218 = vsel %vm216, %v215, %v213
          %v219 = vrot.slane %v214, 1
          %v220 = vrot.slane %v215, 1
          %vm221 = vcmp.ge.f32.partialorder %v219, %v217
          %v222 = vsel %vm221, %v219, %v217
          %v223 = vsel %vm221, %v220, %v218
          %s224 = ssub.s32 128, %s169
          %225 = vrot.lane.b32.xlu0 %v223, %s224
          %v226 = vpop.permute.xlu0 %225
          %s227 = vtos %v226
          %v228 = vstv %s169
          %v229 = vlaneseq
          %v230 = vand.u32 %v229, 127
          %vm231 = vcmp.eq.s32.totalorder %v230, %v228
          %v232 = vstv %s227
          %v233 = vld [vmem:[%s159] ss:$0 sm:$0xff]
          %v234 = vsel %vm231, %v232, %v233
          %235 = vst [vmem:[%s159] sm:$0x1] %v234
          %s236 = scalar_lea.vmem %s140, %s169 [#allocation1]
          %s237 = scalar_lea.vmem %s140, %s227 [#allocation1]
          %v238 = vld [vmem:[%s236] ss:$0 sm:$0xff]
          %v239 = vld [vmem:[%s237] ss:$0 sm:$0xff]
          %240 = vst [vmem:[%s237] sm:$0x1] %v238
          %241 = vst [vmem:[%s236] sm:$0x1] %v239
          %s242 = scalar_lea.vmem [#allocation7], %s169
          %s243 = scalar_lea.vmem [#allocation7], %s227
          %v244 = vld [vmem:[%s242] ss:$0 sm:$0xff]
          %v245 = vld [vmem:[%s243] ss:$0 sm:$0xff]
          %246 = vst [vmem:[%s243] sm:$0x1] %v244
          %247 = vst [vmem:[%s242] sm:$0x1] %v245
          %vm248 = vcmp.ne.f32.partialorder %v239, 0.0
          %vm249 = vmand %vm231, %vm248
          %v250 = vsel %vm249, %v239, 1.0
          %v251 = vlaneseq
          %v252 = vand.u32 %v251, 127
          %v253 = vstv %s169
          %vm254 = vcmp.gt.s32.totalorder %v252, %v253
          %v255 = vsel %vm254, %v239, 0.0
          %v256 = vlaneseq
          %v257 = vshrl.u32 %v256, 7
          %v258 = vmov %v257
          %v259 = vld [vmem:[%s140] sm:$0xff]
          %v261 = vstv %s169
          %vm262 = vcmp.gt.s32.totalorder %v258, %v261
          %v263 = vsel %vm262, %v250, 1.0
          %v264 = vrcp.pop %v263
          %v265 = vmul.f32 %v259, %v264
          %vm266 = vmand %vm262, %vm231
          %v267 = vsel %vm266, %v265, 0.0
          %268 = vadd.xlane.f32.xlu0 %v267
          %v269 = vpop.xlane.xlu0 %268
          %v270 = vmul.f32 %v269, %v255
          %v271 = vsub.f32 %v265, %v270
          %272 = vst [vmem:[%s140] sm:$0xff] %v271
        $region60: #{custom-call.11} parent=53 // loop_footer
          %s173 = sadd.s32 1, %s169
        $region61: #{custom-call.11} parent=53 // loop_footer_branch
          %168 = sbr.rel target = $region57
        $region62: #{custom-call.11} parent=53 // loop_exit
          _
        %v273 = vld [vmem:[#allocation7] sm:$0xff]
        %s274 = scalar_lea.vmem [#allocation7], 8
        %s275 = scalar_lea.vmem [#allocation7], 16
        %s276 = scalar_lea.vmem [#allocation7], 24
        %s277 = scalar_lea.vmem [#allocation7], 32
        %s278 = scalar_lea.vmem [#allocation7], 40
        %s279 = scalar_lea.vmem [#allocation7], 48
        %s280 = scalar_lea.vmem [#allocation7], 56
        %s281 = scalar_lea.vmem [#allocation7], 64
        %s282 = scalar_lea.vmem [#allocation7], 72
        %s283 = scalar_lea.vmem [#allocation7], 80
        %s284 = scalar_lea.vmem [#allocation7], 88
        %s285 = scalar_lea.vmem [#allocation7], 96
        %s286 = scalar_lea.vmem [#allocation7], 104
        %s287 = scalar_lea.vmem [#allocation7], 112
        %s288 = scalar_lea.vmem [#allocation7], 120
        %289 = vxpose.xlu0.b32.start [1/16] %v273, 128
        %290 = vxpose.xlu0.b32.cont [2/16] 0, 128
        %291 = vxpose.xlu0.b32.cont [3/16] 0, 128
        %292 = vxpose.xlu0.b32.cont [4/16] 0, 128
        %293 = vxpose.xlu0.b32.cont [5/16] 0, 128
        %294 = vxpose.xlu0.b32.cont [6/16] 0, 128
        %295 = vxpose.xlu0.b32.cont [7/16] 0, 128
        %296 = vxpose.xlu0.b32.cont [8/16] 0, 128
        %297 = vxpose.xlu0.b32.cont [9/16] 0, 128
        %298 = vxpose.xlu0.b32.cont [10/16] 0, 128
        %299 = vxpose.xlu0.b32.cont [11/16] 0, 128
        %300 = vxpose.xlu0.b32.cont [12/16] 0, 128
        %301 = vxpose.xlu0.b32.cont [13/16] 0, 128
        %302 = vxpose.xlu0.b32.cont [14/16] 0, 128
        %303 = vxpose.xlu0.b32.cont [15/16] 0, 128
        %304 = vxpose.xlu0.b32.end [16/16] 0, 128
        %v305 = vpop.trf.xlu0
        %v306 = vpop.trf.xlu0
        %v307 = vpop.trf.xlu0
        %v308 = vpop.trf.xlu0
        %v309 = vpop.trf.xlu0
        %v310 = vpop.trf.xlu0
        %v311 = vpop.trf.xlu0
        %v312 = vpop.trf.xlu0
        %v313 = vpop.trf.xlu0
        %v314 = vpop.trf.xlu0
        %v315 = vpop.trf.xlu0
        %v316 = vpop.trf.xlu0
        %v317 = vpop.trf.xlu0
        %v318 = vpop.trf.xlu0
        %v319 = vpop.trf.xlu0
        %v320 = vpop.trf.xlu0
        %321 = vst [vmem:[%s161] sm:$0x1] %v305
        %s323 = sshllo.u32 0, 2
        %v325 = vld [vmem:[#allocation2] sm:%s323]
        %s326 = sshllo.u32 0, 2
        %327 = vst [vmem:[%s147] sm:%s326] %v325
        %s329 = sshllo.u32 0, 2
        %v331 = vld [vmem:[#allocation5] sm:%s329]
        %s332 = sshllo.u32 0, 2
        %333 = vst [vmem:[%s153] sm:%s332] %v331
        %s334 = sand.u32 %s14, 1
        %s335 = sand.u32 %s14, 1
        %s336 = smul.addr %s335, 8
        %s337 = scalar_lea.vmem [#allocation1], %s336
        %s338 = sand.u32 %s24, 1
        %s339 = scalar_lea.sflag [#allocation4], %s338
        %s340 = sand.u32 %s24, 1
        %s341 = smul.addr %s340, 2
        %s342 = scalar_lea.vmem [#allocation3], %s341
        %s343 = sand.u32 %s52, 1
        %s344 = sand.u32 %s52, 1
        %s345 = smul.addr %s344, 2
        %s346 = scalar_lea.vmem [#allocation6], %s345
        %s347 = smul.addr %s14, 8
        %s348 = scalar_lea.vmem %s1, %s347
        // Predicated region
        $region63: #{custom-call.11} parent=53 // pred_check
          _
        $region64: #{custom-call.11} parent=53 // pred_check_branch
          %350 = sbr.rel (0) target = $region66
        $region65: #{custom-call.11} parent=53 // pred_region
          // Predicated region
          $region67: #{custom-call.11} parent=65 // pred_check
            _
          $region68: #{custom-call.11} parent=65 // pred_check_branch
            %352 = sbr.rel (0) target = $region70
          $region69: #{custom-call.11} parent=65 // pred_region
            // Predicated region
            $region82: #{custom-call.11} parent=69 // pred_check
              _
            $region83: #{custom-call.11} parent=69 // pred_check_branch
              %367 = sbr.rel (0) target = $region85
            $region84: #{custom-call.11} parent=69 // pred_region
              loop: start=0, step=1, limit=1
              $region86: #{custom-call.11} parent=84 // loop_pre_header
                _
              $region87: #{custom-call.11} parent=84 // loop_header
                %s369 = sphi 0, %s373
                %p370 = scmp.ge.s32.totalorder %s369, 1
                %s374 = sphi %s337, %s337
                %s375 = sphi %s348, %s348
              $region88: #{custom-call.11} parent=84 // loop_header_branch
                %372 = sbr.rel (%p370) target = $region92
              $region89: #{custom-call.11} parent=84 // loop_body
                %v376 = vld [vmem:[%s374] sm:$0xff]
                %377 = vst [vmem:[%s375] sm:$0xff] %v376
              $region90: #{custom-call.11} parent=84 // loop_footer
                %s373 = sadd.s32 1, %s369
              $region91: #{custom-call.11} parent=84 // loop_footer_branch
                %368 = sbr.rel target = $region87
              $region92: #{custom-call.11} parent=84 // loop_exit
                _
            $region85: #{custom-call.11} parent=69 // pred_fallthru
              _
            // Predicated region
            $region93: #{custom-call.11} parent=69 // pred_check
              _
            $region94: #{custom-call.11} parent=69 // pred_check_branch
              %379 = sbr.rel target = $region96
            $region95: #{custom-call.11} parent=69 // pred_region
              _
            $region96: #{custom-call.11} parent=69 // pred_fallthru
              _
          $region70: #{custom-call.11} parent=65 // pred_fallthru
            _
          // Predicated region
          $region71: #{custom-call.11} parent=65 // pred_check
            _
          $region72: #{custom-call.11} parent=65 // pred_check_branch
            %354 = sbr.rel target = $region74
          $region73: #{custom-call.11} parent=65 // pred_region
            loop: start=0, step=1, limit=1
            $region75: #{custom-call.11} parent=73 // loop_pre_header
              _
            $region76: #{custom-call.11} parent=73 // loop_header
              %s357 = sphi 0, %s361
              %p358 = scmp.ge.s32.totalorder %s357, 1
              %s362 = sphi %s337, %s337
              %s363 = sphi %s348, %s348
            $region77: #{custom-call.11} parent=73 // loop_header_branch
              %360 = sbr.rel (%p358) target = $region81
            $region78: #{custom-call.11} parent=73 // loop_body
              %v364 = vld [vmem:[%s362] sm:$0xff]
              %365 = vst [vmem:[%s363] sm:$0xff] %v364
            $region79: #{custom-call.11} parent=73 // loop_footer
              %s361 = sadd.s32 1, %s357
            $region80: #{custom-call.11} parent=73 // loop_footer_branch
              %356 = sbr.rel target = $region76
            $region81: #{custom-call.11} parent=73 // loop_exit
              _
          $region74: #{custom-call.11} parent=65 // pred_fallthru
            _
        $region66: #{custom-call.11} parent=53 // pred_fallthru
          _
        %380 = vnop
        // Predicated region
        $region97: #{custom-call.11} parent=53 // pred_check
          %p381 = pneg %p34
        $region98: #{custom-call.11} parent=53 // pred_check_branch
          %383 = sbr.rel (%p381) target = $region100
        $region99: #{custom-call.11} parent=53 // pred_region
          %s384 = sshrl.u32 %s14, 3
          %s386 = ssub.s32 32, 32
          %387 = vsyncadd %s339, %s386
          %s388 = smul.addr %s384, 32
          %s389 = scalar_lea.hbm %s2, %s388
          %s391 = sshll.u32 %s342, 4
          %s392 = int_to_ptr.vmem [resolvable:$true] %s391
          %394 = dma.vmem_to_hbm [thread:$0]  %s392, 32, %s389, %s339
        $region100: #{custom-call.11} parent=53 // pred_fallthru
          _
        // Predicated region
        $region101: #{custom-call.11} parent=53 // pred_check
          %p395 = pneg %p62
        $region102: #{custom-call.11} parent=53 // pred_check_branch
          %397 = sbr.rel (%p395) target = $region104
        $region103: #{custom-call.11} parent=53 // pred_region
          %s398 = sshrl.u32 %s14, 3
          %s399 = smul.addr %s398, 2
          %s400 = scalar_lea.vmem %s3, %s399
          // Predicated region
          $region105: #{custom-call.11} parent=103 // pred_check
            _
          $region106: #{custom-call.11} parent=103 // pred_check_branch
            %402 = sbr.rel (0) target = $region108
          $region107: #{custom-call.11} parent=103 // pred_region
            // Predicated region
            $region109: #{custom-call.11} parent=107 // pred_check
              _
            $region110: #{custom-call.11} parent=107 // pred_check_branch
              %404 = sbr.rel target = $region112
            $region111: #{custom-call.11} parent=107 // pred_region
              // Predicated region
              $region124: #{custom-call.11} parent=111 // pred_check
                _
              $region125: #{custom-call.11} parent=111 // pred_check_branch
                %419 = sbr.rel (0) target = $region127
              $region126: #{custom-call.11} parent=111 // pred_region
                loop: start=0, step=1, limit=1
                $region128: #{custom-call.11} parent=126 // loop_pre_header
                  _
                $region129: #{custom-call.11} parent=126 // loop_header
                  %s422 = sphi 0, %s426
                  %p423 = scmp.ge.s32.totalorder %s422, 1
                  %s427 = sphi %s346, %s346
                  %s428 = sphi %s400, %s400
                $region130: #{custom-call.11} parent=126 // loop_header_branch
                  %425 = sbr.rel (%p423) target = $region134
                $region131: #{custom-call.11} parent=126 // loop_body
                  %v429 = vld [vmem:[%s427] sm:$0x3]
                  %430 = vst [vmem:[%s428] sm:$0x3] %v429
                $region132: #{custom-call.11} parent=126 // loop_footer
                  %s426 = sadd.s32 1, %s422
                $region133: #{custom-call.11} parent=126 // loop_footer_branch
                  %421 = sbr.rel target = $region129
                $region134: #{custom-call.11} parent=126 // loop_exit
                  _
              $region127: #{custom-call.11} parent=111 // pred_fallthru
                _
            $region112: #{custom-call.11} parent=107 // pred_fallthru
              _
            // Predicated region
            $region113: #{custom-call.11} parent=107 // pred_check
              _
            $region114: #{custom-call.11} parent=107 // pred_check_branch
              %406 = sbr.rel (0) target = $region116
            $region115: #{custom-call.11} parent=107 // pred_region
              loop: start=0, step=1, limit=1
              $region117: #{custom-call.11} parent=115 // loop_pre_header
                _
              $region118: #{custom-call.11} parent=115 // loop_header
                %s409 = sphi 0, %s413
                %p410 = scmp.ge.s32.totalorder %s409, 1
                %s414 = sphi %s346, %s346
                %s415 = sphi %s400, %s400
              $region119: #{custom-call.11} parent=115 // loop_header_branch
                %412 = sbr.rel (%p410) target = $region123
              $region120: #{custom-call.11} parent=115 // loop_body
                %v416 = vld [vmem:[%s414] sm:$0x3]
                %417 = vst [vmem:[%s415] sm:$0x3] %v416
              $region121: #{custom-call.11} parent=115 // loop_footer
                %s413 = sadd.s32 1, %s409
              $region122: #{custom-call.11} parent=115 // loop_footer_branch
                %408 = sbr.rel target = $region118
              $region123: #{custom-call.11} parent=115 // loop_exit
                _
            $region116: #{custom-call.11} parent=107 // pred_fallthru
              _
          $region108: #{custom-call.11} parent=103 // pred_fallthru
            _
          %431 = vnop
        $region104: #{custom-call.11} parent=53 // pred_fallthru
          _
      $region54: #{custom-call.11} parent=5 // pred_fallthru
        _
      %p432 = scmp.le.s32.totalorder 2, %s9
      // Predicated region
      $region135: #{custom-call.11} parent=5 // pred_check
        %p433 = pneg %p432
      $region136: #{custom-call.11} parent=5 // pred_check_branch
        %435 = sbr.rel (%p433) target = $region138
      $region137: #{custom-call.11} parent=5 // pred_region
        %s436 = ssub.s32 %s9, 2
        %s437 = sand.u32 %s15, 1
        %s438 = sand.u32 %s15, 1
        %s439 = smul.addr %s438, 8
        %s440 = scalar_lea.vmem [#allocation1], %s439
        // Predicated region
        $region139: #{custom-call.11} parent=137 // pred_check
          %p441 = pneg %p40
        $region140: #{custom-call.11} parent=137 // pred_check_branch
          %443 = sbr.rel (%p441) target = $region142
        $region141: #{custom-call.11} parent=137 // pred_region
          %s444 = sand.u32 %s25, 1
          %s445 = scalar_lea.sflag [#allocation4], %s444
          %s446 = sand.u32 %s25, 1
          %s447 = smul.addr %s446, 2
          %s448 = scalar_lea.vmem [#allocation3], %s447
          %449 = dma.done %s445, 32
        $region142: #{custom-call.11} parent=137 // pred_fallthru
          _
        // Predicated region
        $region143: #{custom-call.11} parent=137 // pred_check
          %p450 = pneg %p68
        $region144: #{custom-call.11} parent=137 // pred_check_branch
          %452 = sbr.rel (%p450) target = $region146
        $region145: #{custom-call.11} parent=137 // pred_region
          %s453 = sand.u32 %s53, 1
          %s454 = sand.u32 %s53, 1
          %s455 = smul.addr %s454, 2
          %s456 = scalar_lea.vmem [#allocation6], %s455
        $region146: #{custom-call.11} parent=137 // pred_fallthru
          _
      $region138: #{custom-call.11} parent=5 // pred_fallthru
        _
    $region6: #{custom-call.11} parent=1 // loop_footer
      %s13 = sadd.s32 1, %s9
    $region7: #{custom-call.11} parent=1 // loop_footer_branch
      %8 = sbr.rel target = $region3
    $region8: #{custom-call.11} parent=1 // loop_exit
      _
    %457 = vsyncpa [#allocation4], 1
    %s458 = scalar_lea.sflag [#allocation4], 1
    %459 = vsyncpa %s458, 1

// kernel: custom-call.12
$region0: #{custom-call.12}
  %s0 = inlined_call_operand.vmem [shape: f32[2,1,8,8], index: 0, kind: input, shape index: {}]
  %s1 = inlined_call_operand.vmem [shape: f32[2,1,8,8], index: 1, kind: output, shape index: {}]
  $region1: #{custom-call.12} parent=0
    #allocation0 [shape = 'u8[8192]{0}', space=vmem, size = 0x2000, scoped, tag = 'operand span for operand 0']
    #allocation1 [shape = 'u8[8192]{0}', space=vmem, size = 0x2000, scoped, tag = 'operand span for operand 1']
    loop: start=0, step=1, limit=4
    $region2: #{custom-call.12} parent=1 // loop_pre_header
      _
    $region3: #{custom-call.12} parent=1 // loop_header
      %s3 = sphi 0, %s7
      %p4 = scmp.ge.s32.totalorder %s3, 4
      %s10 = sphi 0, %s36
      %s11 = sphi 0, %s32
      %s12 = sphi 0, %s28
      %s13 = sphi 0, %s24
      %s14 = sphi 0, %s10
      %s15 = sphi 0, %s11
      %s16 = sphi 0, %s12
      %s17 = sphi 0, %s13
      %s18 = sphi 0, %s14
      %s19 = sphi 0, %s15
      %s20 = sphi 0, %s16
      %s21 = sphi 0, %s17
    $region4: #{custom-call.12} parent=1 // loop_header_branch
      %6 = sbr.rel (%p4) target = $region8
    $region5: #{custom-call.12} parent=1 // loop_body
      %s8 = ssub.s32 %s3, 1
      %s9 = ssub.s32 %s3, 2
      %s22 = sadd.s32 1, %s13
      %p23 = scmp.ge.s32.totalorder %s22, 1
      %s24 = scalar_select %p23, 0, %s22
      %s25 = sadd.s32 1, %s12
      %s26 = scalar_select %p23, %s25, %s12
      %p27 = scmp.ge.s32.totalorder %s26, 1
      %s28 = scalar_select %p27, 0, %s26
      %s29 = sadd.s32 1, %s11
      %s30 = scalar_select %p27, %s29, %s11
      %p31 = scmp.ge.s32.totalorder %s30, 1
      %s32 = scalar_select %p31, 0, %s30
      %s33 = sadd.s32 1, %s10
      %s34 = scalar_select %p31, %s33, %s10
      %p35 = scmp.ge.s32.totalorder %s34, 2
      %s36 = scalar_select %p35, 0, %s34
      %p37 = scmp.le.s32.totalorder 1, %s3
      %p38 = scmp.lt.s32.totalorder %s3, 3
      %p39 = pnand %p37, %p38
      %p40 = pneg %p39
      // Predicated region
      $region9: #{custom-call.12} parent=5 // pred_check
        _
      $region10: #{custom-call.12} parent=5 // pred_check_branch
        %42 = sbr.rel (%p39) target = $region12
      $region11: #{custom-call.12} parent=5 // pred_region
        %s43 = ssub.s32 %s3, 1
      $region12: #{custom-call.12} parent=5 // pred_fallthru
        _
      %p44 = scmp.lt.s32.totalorder %s3, 2
      // Predicated region
      $region13: #{custom-call.12} parent=5 // pred_check
        %p45 = pneg %p44
      $region14: #{custom-call.12} parent=5 // pred_check_branch
        %47 = sbr.rel (%p45) target = $region16
      $region15: #{custom-call.12} parent=5 // pred_region
        %s48 = sand.u32 %s3, 1
        %s49 = sand.u32 %s3, 1
        %s50 = smul.addr %s49, 8
        %s51 = scalar_lea.vmem [#allocation0], %s50
        %s52 = sadd.s32 %s13, %s12
        %s53 = sadd.s32 %s52, %s11
        %s54 = sadd.s32 %s53, %s10
        %s55 = smul.addr %s54, 8
        %s56 = scalar_lea.vmem %s0, %s55
        // Predicated region
        $region17: #{custom-call.12} parent=15 // pred_check
          _
        $region18: #{custom-call.12} parent=15 // pred_check_branch
          %58 = sbr.rel (0) target = $region20
        $region19: #{custom-call.12} parent=15 // pred_region
          // Predicated region
          $region21: #{custom-call.12} parent=19 // pred_check
            _
          $region22: #{custom-call.12} parent=19 // pred_check_branch
            %60 = sbr.rel (0) target = $region24
          $region23: #{custom-call.12} parent=19 // pred_region
            // Predicated region
            $region36: #{custom-call.12} parent=23 // pred_check
              _
            $region37: #{custom-call.12} parent=23 // pred_check_branch
              %75 = sbr.rel (0) target = $region39
            $region38: #{custom-call.12} parent=23 // pred_region
              loop: start=0, step=1, limit=1
              $region40: #{custom-call.12} parent=38 // loop_pre_header
                _
              $region41: #{custom-call.12} parent=38 // loop_header
                %s77 = sphi 0, %s81
                %p78 = scmp.ge.s32.totalorder %s77, 1
                %s82 = sphi %s56, %s56
                %s83 = sphi %s51, %s51
              $region42: #{custom-call.12} parent=38 // loop_header_branch
                %80 = sbr.rel (%p78) target = $region46
              $region43: #{custom-call.12} parent=38 // loop_body
                %v84 = vld [vmem:[%s82] sm:$0xff]
                %85 = vst [vmem:[%s83] sm:$0xff] %v84
              $region44: #{custom-call.12} parent=38 // loop_footer
                %s81 = sadd.s32 1, %s77
              $region45: #{custom-call.12} parent=38 // loop_footer_branch
                %76 = sbr.rel target = $region41
              $region46: #{custom-call.12} parent=38 // loop_exit
                _
            $region39: #{custom-call.12} parent=23 // pred_fallthru
              _
            // Predicated region
            $region47: #{custom-call.12} parent=23 // pred_check
              _
            $region48: #{custom-call.12} parent=23 // pred_check_branch
              %87 = sbr.rel target = $region50
            $region49: #{custom-call.12} parent=23 // pred_region
              _
            $region50: #{custom-call.12} parent=23 // pred_fallthru
              _
          $region24: #{custom-call.12} parent=19 // pred_fallthru
            _
          // Predicated region
          $region25: #{custom-call.12} parent=19 // pred_check
            _
          $region26: #{custom-call.12} parent=19 // pred_check_branch
            %62 = sbr.rel target = $region28
          $region27: #{custom-call.12} parent=19 // pred_region
            loop: start=0, step=1, limit=1
            $region29: #{custom-call.12} parent=27 // loop_pre_header
              _
            $region30: #{custom-call.12} parent=27 // loop_header
              %s65 = sphi 0, %s69
              %p66 = scmp.ge.s32.totalorder %s65, 1
              %s70 = sphi %s56, %s56
              %s71 = sphi %s51, %s51
            $region31: #{custom-call.12} parent=27 // loop_header_branch
              %68 = sbr.rel (%p66) target = $region35
            $region32: #{custom-call.12} parent=27 // loop_body
              %v72 = vld [vmem:[%s70] sm:$0xff]
              %73 = vst [vmem:[%s71] sm:$0xff] %v72
            $region33: #{custom-call.12} parent=27 // loop_footer
              %s69 = sadd.s32 1, %s65
            $region34: #{custom-call.12} parent=27 // loop_footer_branch
              %64 = sbr.rel target = $region30
            $region35: #{custom-call.12} parent=27 // loop_exit
              _
          $region28: #{custom-call.12} parent=19 // pred_fallthru
            _
        $region20: #{custom-call.12} parent=15 // pred_fallthru
          _
        %88 = vnop
      $region16: #{custom-call.12} parent=5 // pred_fallthru
        _
      %p89 = scmp.le.s32.totalorder 1, %s3
      %p90 = scmp.lt.s32.totalorder %s3, 3
      %p91 = pnand %p89, %p90
      %p92 = pneg %p91
      // Predicated region
      $region51: #{custom-call.12} parent=5 // pred_check
        _
      $region52: #{custom-call.12} parent=5 // pred_check_branch
        %94 = sbr.rel (%p91) target = $region54
      $region53: #{custom-call.12} parent=5 // pred_region
        #allocation2 [shape = 'f32[8,8]{1,0}', space=vmem, size = 0x1000, scoped, tag = 'rescaled input a']
        %s95 = ssub.s32 %s3, 1
        %s96 = sand.u32 %s8, 1
        %s97 = sand.u32 %s8, 1
        %s98 = smul.addr %s97, 8
        %s99 = scalar_lea.vmem [#allocation0], %s98
        %s100 = sand.u32 %s8, 1
        %s101 = sand.u32 %s8, 1
        %s102 = smul.addr %s101, 8
        %s103 = scalar_lea.vmem [#allocation0], %s102
        %s104 = sand.u32 %s8, 1
        %s105 = sand.u32 %s8, 1
        %s106 = smul.addr %s105, 8
        %s107 = scalar_lea.vmem [#allocation1], %s106
        %v108 = vlaneseq
        %v109 = vand.u32 %v108, 127
        %vm110 = vcmp.lt.s32.totalorder %v109, 8
        %v111 = vlaneseq
        %v112 = vshrl.u32 %v111, 7
        %vm114 = vcmp.eq.s32.totalorder %v112, %v109
        %v115 = vld [vmem:[%s99] sm:$0xff]
        %v116 = vsel %vm114, %v115, 0.0
        %117 = vadd.xlane.f32.xlu0 %v116
        %v118 = vpop.xlane.xlu0 %117
        %vm119 = vcmp.le.s32.totalorder %v112, %v109
        %vm120 = vmand %vm119, %vm110
        %v121 = vsel %vm120, %v115, 0.0
        %v122 = vrcp.pop %v118
        %v123 = vmul.f32 %v121, %v122
        %124 = vst [vmem:[#allocation2] sm:$0xff] %v123
        %v125 = vlaneseq
        %v126 = vand.u32 %v125, 127
        %v127 = vlaneseq
        %v128 = vshrl.u32 %v127, 7
        %vm130 = vcmp.eq.s32.totalorder %v126, %v128
        %v131 = vlaneseq
        %v132 = vand.u32 %v131, 127
        %vm133 = vcmp.eq.s32.totalorder %v132, 7
        %v134 = vsel %vm133, 1.0, -1.0
        %v135 = vsel %vm130, %v134, 0.0
        %s136 = scalar_lea.vmem [#allocation2], 6
        %v137 = vld [vmem:[%s136] ss:$0 sm:$0xff]
        %v138 = vxor.u32 %v137, 2147483648
        %v139 = vlaneseq
        %v140 = vand.u32 %v139, 127
        %vm141 = vcmp.eq.s32.totalorder %v140, 6
        %v142 = vmul.f32 %v138, %v135
        %143 = vadd.xlane.f32.xlu0 %v142
        %v144 = vpop.xlane.xlu0 %143
        %v145 = vsel %vm141, %v144, %v135
        %s146 = scalar_lea.vmem [#allocation2], 5
        %v147 = vld [vmem:[%s146] ss:$0 sm:$0xff]
        %v148 = vxor.u32 %v147, 2147483648
        %v149 = vlaneseq
        %v150 = vand.u32 %v149, 127
        %vm151 = vcmp.eq.s32.totalorder %v150, 5
        %v152 = vmul.f32 %v148, %v145
        %153 = vadd.xlane.f32.xlu0 %v152
        %v154 = vpop.xlane.xlu0 %153
        %v155 = vsel %vm151, %v154, %v145
        %s156 = scalar_lea.vmem [#allocation2], 4
        %v157 = vld [vmem:[%s156] ss:$0 sm:$0xff]
        %v158 = vxor.u32 %v157, 2147483648
        %v159 = vlaneseq
        %v160 = vand.u32 %v159, 127
        %vm161 = vcmp.eq.s32.totalorder %v160, 4
        %v162 = vmul.f32 %v158, %v155
        %163 = vadd.xlane.f32.xlu0 %v162
        %v164 = vpop.xlane.xlu0 %163
        %v165 = vsel %vm161, %v164, %v155
        %s166 = scalar_lea.vmem [#allocation2], 3
        %v167 = vld [vmem:[%s166] ss:$0 sm:$0xff]
        %v168 = vxor.u32 %v167, 2147483648
        %v169 = vlaneseq
        %v170 = vand.u32 %v169, 127
        %vm171 = vcmp.eq.s32.totalorder %v170, 3
        %v172 = vmul.f32 %v168, %v165
        %173 = vadd.xlane.f32.xlu0 %v172
        %v174 = vpop.xlane.xlu0 %173
        %v175 = vsel %vm171, %v174, %v165
        %s176 = scalar_lea.vmem [#allocation2], 2
        %v177 = vld [vmem:[%s176] ss:$0 sm:$0xff]
        %v178 = vxor.u32 %v177, 2147483648
        %v179 = vlaneseq
        %v180 = vand.u32 %v179, 127
        %vm181 = vcmp.eq.s32.totalorder %v180, 2
        %v182 = vmul.f32 %v178, %v175
        %183 = vadd.xlane.f32.xlu0 %v182
        %v184 = vpop.xlane.xlu0 %183
        %v185 = vsel %vm181, %v184, %v175
        %s186 = scalar_lea.vmem [#allocation2], 1
        %v187 = vld [vmem:[%s186] ss:$0 sm:$0xff]
        %v188 = vxor.u32 %v187, 2147483648
        %v189 = vlaneseq
        %v190 = vand.u32 %v189, 127
        %vm191 = vcmp.eq.s32.totalorder %v190, 1
        %v192 = vmul.f32 %v188, %v185
        %193 = vadd.xlane.f32.xlu0 %v192
        %v194 = vpop.xlane.xlu0 %193
        %v195 = vsel %vm191, %v194, %v185
        %v196 = vld [vmem:[#allocation2] ss:$0 sm:$0xff]
        %v197 = vxor.u32 %v196, 2147483648
        %v198 = vlaneseq
        %v199 = vand.u32 %v198, 127
        %vm200 = vcmp.eq.s32.totalorder %v199, 0
        %v201 = vmul.f32 %v197, %v195
        %202 = vadd.xlane.f32.xlu0 %v201
        %v203 = vpop.xlane.xlu0 %202
        %v204 = vsel %vm200, %v203, %v195
        %v205 = vrcp.pop %v118
        %v206 = vmul.f32 %v204, %v205
        %vm207 = vweird.f32 %v118
        %v208 = vsel %vm207, %v204, %v206
        %209 = vst [vmem:[%s107] sm:$0xff] %v208
        %s210 = sand.u32 %s8, 1
        %s211 = sand.u32 %s8, 1
        %s212 = smul.addr %s211, 8
        %s213 = scalar_lea.vmem [#allocation1], %s212
        %s214 = sadd.s32 %s17, %s16
        %s215 = sadd.s32 %s214, %s15
        %s216 = sadd.s32 %s215, %s14
        %s217 = smul.addr %s216, 8
        %s218 = scalar_lea.vmem %s1, %s217
        // Predicated region
        $region55: #{custom-call.12} parent=53 // pred_check
          _
        $region56: #{custom-call.12} parent=53 // pred_check_branch
          %220 = sbr.rel (0) target = $region58
        $region57: #{custom-call.12} parent=53 // pred_region
          // Predicated region
          $region59: #{custom-call.12} parent=57 // pred_check
            _
          $region60: #{custom-call.12} parent=57 // pred_check_branch
            %222 = sbr.rel (0) target = $region62
          $region61: #{custom-call.12} parent=57 // pred_region
            // Predicated region
            $region74: #{custom-call.12} parent=61 // pred_check
              _
            $region75: #{custom-call.12} parent=61 // pred_check_branch
              %237 = sbr.rel (0) target = $region77
            $region76: #{custom-call.12} parent=61 // pred_region
              loop: start=0, step=1, limit=1
              $region78: #{custom-call.12} parent=76 // loop_pre_header
                _
              $region79: #{custom-call.12} parent=76 // loop_header
                %s239 = sphi 0, %s243
                %p240 = scmp.ge.s32.totalorder %s239, 1
                %s244 = sphi %s213, %s213
                %s245 = sphi %s218, %s218
              $region80: #{custom-call.12} parent=76 // loop_header_branch
                %242 = sbr.rel (%p240) target = $region84
              $region81: #{custom-call.12} parent=76 // loop_body
                %v246 = vld [vmem:[%s244] sm:$0xff]
                %247 = vst [vmem:[%s245] sm:$0xff] %v246
              $region82: #{custom-call.12} parent=76 // loop_footer
                %s243 = sadd.s32 1, %s239
              $region83: #{custom-call.12} parent=76 // loop_footer_branch
                %238 = sbr.rel target = $region79
              $region84: #{custom-call.12} parent=76 // loop_exit
                _
            $region77: #{custom-call.12} parent=61 // pred_fallthru
              _
            // Predicated region
            $region85: #{custom-call.12} parent=61 // pred_check
              _
            $region86: #{custom-call.12} parent=61 // pred_check_branch
              %249 = sbr.rel target = $region88
            $region87: #{custom-call.12} parent=61 // pred_region
              _
            $region88: #{custom-call.12} parent=61 // pred_fallthru
              _
          $region62: #{custom-call.12} parent=57 // pred_fallthru
            _
          // Predicated region
          $region63: #{custom-call.12} parent=57 // pred_check
            _
          $region64: #{custom-call.12} parent=57 // pred_check_branch
            %224 = sbr.rel target = $region66
          $region65: #{custom-call.12} parent=57 // pred_region
            loop: start=0, step=1, limit=1
            $region67: #{custom-call.12} parent=65 // loop_pre_header
              _
            $region68: #{custom-call.12} parent=65 // loop_header
              %s227 = sphi 0, %s231
              %p228 = scmp.ge.s32.totalorder %s227, 1
              %s232 = sphi %s213, %s213
              %s233 = sphi %s218, %s218
            $region69: #{custom-call.12} parent=65 // loop_header_branch
              %230 = sbr.rel (%p228) target = $region73
            $region70: #{custom-call.12} parent=65 // loop_body
              %v234 = vld [vmem:[%s232] sm:$0xff]
              %235 = vst [vmem:[%s233] sm:$0xff] %v234
            $region71: #{custom-call.12} parent=65 // loop_footer
              %s231 = sadd.s32 1, %s227
            $region72: #{custom-call.12} parent=65 // loop_footer_branch
              %226 = sbr.rel target = $region68
            $region73: #{custom-call.12} parent=65 // loop_exit
              _
          $region66: #{custom-call.12} parent=57 // pred_fallthru
            _
        $region58: #{custom-call.12} parent=53 // pred_fallthru
          _
        %250 = vnop
      $region54: #{custom-call.12} parent=5 // pred_fallthru
        _
      %p251 = scmp.le.s32.totalorder 2, %s3
      // Predicated region
      $region89: #{custom-call.12} parent=5 // pred_check
        %p252 = pneg %p251
      $region90: #{custom-call.12} parent=5 // pred_check_branch
        %254 = sbr.rel (%p252) target = $region92
      $region91: #{custom-call.12} parent=5 // pred_region
        %s255 = ssub.s32 %s3, 2
        %s256 = sand.u32 %s9, 1
        %s257 = sand.u32 %s9, 1
        %s258 = smul.addr %s257, 8
        %s259 = scalar_lea.vmem [#allocation1], %s258
      $region92: #{custom-call.12} parent=5 // pred_fallthru
        _
    $region6: #{custom-call.12} parent=1 // loop_footer
      %s7 = sadd.s32 1, %s3
    $region7: #{custom-call.12} parent=1 // loop_footer_branch
      %2 = sbr.rel target = $region3
    $region8: #{custom-call.12} parent=1 // loop_exit
      _

// kernel: custom-call.13
$region0: #{custom-call.13}
  %s0 = inlined_call_operand.vmem [shape: f32[2,1,8,8], index: 0, kind: input, shape index: {}]
  %s1 = inlined_call_operand.vmem [shape: f32[2,1,8,8], index: 1, kind: output, shape index: {}]
  $region1: #{custom-call.13} parent=0
    #allocation0 [shape = 'u8[8192]{0}', space=vmem, size = 0x2000, scoped, tag = 'operand span for operand 0']
    #allocation1 [shape = 'u8[8192]{0}', space=vmem, size = 0x2000, scoped, tag = 'operand span for operand 1']
    loop: start=0, step=1, limit=4
    $region2: #{custom-call.13} parent=1 // loop_pre_header
      _
    $region3: #{custom-call.13} parent=1 // loop_header
      %s3 = sphi 0, %s7
      %p4 = scmp.ge.s32.totalorder %s3, 4
      %s10 = sphi 0, %s36
      %s11 = sphi 0, %s32
      %s12 = sphi 0, %s28
      %s13 = sphi 0, %s24
      %s14 = sphi 0, %s10
      %s15 = sphi 0, %s11
      %s16 = sphi 0, %s12
      %s17 = sphi 0, %s13
      %s18 = sphi 0, %s14
      %s19 = sphi 0, %s15
      %s20 = sphi 0, %s16
      %s21 = sphi 0, %s17
    $region4: #{custom-call.13} parent=1 // loop_header_branch
      %6 = sbr.rel (%p4) target = $region8
    $region5: #{custom-call.13} parent=1 // loop_body
      %s8 = ssub.s32 %s3, 1
      %s9 = ssub.s32 %s3, 2
      %s22 = sadd.s32 1, %s13
      %p23 = scmp.ge.s32.totalorder %s22, 1
      %s24 = scalar_select %p23, 0, %s22
      %s25 = sadd.s32 1, %s12
      %s26 = scalar_select %p23, %s25, %s12
      %p27 = scmp.ge.s32.totalorder %s26, 1
      %s28 = scalar_select %p27, 0, %s26
      %s29 = sadd.s32 1, %s11
      %s30 = scalar_select %p27, %s29, %s11
      %p31 = scmp.ge.s32.totalorder %s30, 1
      %s32 = scalar_select %p31, 0, %s30
      %s33 = sadd.s32 1, %s10
      %s34 = scalar_select %p31, %s33, %s10
      %p35 = scmp.ge.s32.totalorder %s34, 2
      %s36 = scalar_select %p35, 0, %s34
      %p37 = scmp.le.s32.totalorder 1, %s3
      %p38 = scmp.lt.s32.totalorder %s3, 3
      %p39 = pnand %p37, %p38
      %p40 = pneg %p39
      // Predicated region
      $region9: #{custom-call.13} parent=5 // pred_check
        _
      $region10: #{custom-call.13} parent=5 // pred_check_branch
        %42 = sbr.rel (%p39) target = $region12
      $region11: #{custom-call.13} parent=5 // pred_region
        %s43 = ssub.s32 %s3, 1
      $region12: #{custom-call.13} parent=5 // pred_fallthru
        _
      %p44 = scmp.lt.s32.totalorder %s3, 2
      // Predicated region
      $region13: #{custom-call.13} parent=5 // pred_check
        %p45 = pneg %p44
      $region14: #{custom-call.13} parent=5 // pred_check_branch
        %47 = sbr.rel (%p45) target = $region16
      $region15: #{custom-call.13} parent=5 // pred_region
        %s48 = sand.u32 %s3, 1
        %s49 = sand.u32 %s3, 1
        %s50 = smul.addr %s49, 8
        %s51 = scalar_lea.vmem [#allocation0], %s50
        %s52 = sadd.s32 %s13, %s12
        %s53 = sadd.s32 %s52, %s11
        %s54 = sadd.s32 %s53, %s10
        %s55 = smul.addr %s54, 8
        %s56 = scalar_lea.vmem %s0, %s55
        // Predicated region
        $region17: #{custom-call.13} parent=15 // pred_check
          _
        $region18: #{custom-call.13} parent=15 // pred_check_branch
          %58 = sbr.rel (0) target = $region20
        $region19: #{custom-call.13} parent=15 // pred_region
          // Predicated region
          $region21: #{custom-call.13} parent=19 // pred_check
            _
          $region22: #{custom-call.13} parent=19 // pred_check_branch
            %60 = sbr.rel (0) target = $region24
          $region23: #{custom-call.13} parent=19 // pred_region
            // Predicated region
            $region36: #{custom-call.13} parent=23 // pred_check
              _
            $region37: #{custom-call.13} parent=23 // pred_check_branch
              %75 = sbr.rel (0) target = $region39
            $region38: #{custom-call.13} parent=23 // pred_region
              loop: start=0, step=1, limit=1
              $region40: #{custom-call.13} parent=38 // loop_pre_header
                _
              $region41: #{custom-call.13} parent=38 // loop_header
                %s77 = sphi 0, %s81
                %p78 = scmp.ge.s32.totalorder %s77, 1
                %s82 = sphi %s56, %s56
                %s83 = sphi %s51, %s51
              $region42: #{custom-call.13} parent=38 // loop_header_branch
                %80 = sbr.rel (%p78) target = $region46
              $region43: #{custom-call.13} parent=38 // loop_body
                %v84 = vld [vmem:[%s82] sm:$0xff]
                %85 = vst [vmem:[%s83] sm:$0xff] %v84
              $region44: #{custom-call.13} parent=38 // loop_footer
                %s81 = sadd.s32 1, %s77
              $region45: #{custom-call.13} parent=38 // loop_footer_branch
                %76 = sbr.rel target = $region41
              $region46: #{custom-call.13} parent=38 // loop_exit
                _
            $region39: #{custom-call.13} parent=23 // pred_fallthru
              _
            // Predicated region
            $region47: #{custom-call.13} parent=23 // pred_check
              _
            $region48: #{custom-call.13} parent=23 // pred_check_branch
              %87 = sbr.rel target = $region50
            $region49: #{custom-call.13} parent=23 // pred_region
              _
            $region50: #{custom-call.13} parent=23 // pred_fallthru
              _
          $region24: #{custom-call.13} parent=19 // pred_fallthru
            _
          // Predicated region
          $region25: #{custom-call.13} parent=19 // pred_check
            _
          $region26: #{custom-call.13} parent=19 // pred_check_branch
            %62 = sbr.rel target = $region28
          $region27: #{custom-call.13} parent=19 // pred_region
            loop: start=0, step=1, limit=1
            $region29: #{custom-call.13} parent=27 // loop_pre_header
              _
            $region30: #{custom-call.13} parent=27 // loop_header
              %s65 = sphi 0, %s69
              %p66 = scmp.ge.s32.totalorder %s65, 1
              %s70 = sphi %s56, %s56
              %s71 = sphi %s51, %s51
            $region31: #{custom-call.13} parent=27 // loop_header_branch
              %68 = sbr.rel (%p66) target = $region35
            $region32: #{custom-call.13} parent=27 // loop_body
              %v72 = vld [vmem:[%s70] sm:$0xff]
              %73 = vst [vmem:[%s71] sm:$0xff] %v72
            $region33: #{custom-call.13} parent=27 // loop_footer
              %s69 = sadd.s32 1, %s65
            $region34: #{custom-call.13} parent=27 // loop_footer_branch
              %64 = sbr.rel target = $region30
            $region35: #{custom-call.13} parent=27 // loop_exit
              _
          $region28: #{custom-call.13} parent=19 // pred_fallthru
            _
        $region20: #{custom-call.13} parent=15 // pred_fallthru
          _
        %88 = vnop
      $region16: #{custom-call.13} parent=5 // pred_fallthru
        _
      %p89 = scmp.le.s32.totalorder 1, %s3
      %p90 = scmp.lt.s32.totalorder %s3, 3
      %p91 = pnand %p89, %p90
      %p92 = pneg %p91
      // Predicated region
      $region51: #{custom-call.13} parent=5 // pred_check
        _
      $region52: #{custom-call.13} parent=5 // pred_check_branch
        %94 = sbr.rel (%p91) target = $region54
      $region53: #{custom-call.13} parent=5 // pred_region
        #allocation2 [shape = 'f32[8,8]{1,0}', space=vmem, size = 0x1000, scoped, tag = 'rescaled input a']
        %s95 = ssub.s32 %s3, 1
        %s96 = sand.u32 %s8, 1
        %s97 = sand.u32 %s8, 1
        %s98 = smul.addr %s97, 8
        %s99 = scalar_lea.vmem [#allocation0], %s98
        %s100 = sand.u32 %s8, 1
        %s101 = sand.u32 %s8, 1
        %s102 = smul.addr %s101, 8
        %s103 = scalar_lea.vmem [#allocation0], %s102
        %s104 = sand.u32 %s8, 1
        %s105 = sand.u32 %s8, 1
        %s106 = smul.addr %s105, 8
        %s107 = scalar_lea.vmem [#allocation1], %s106
        %v108 = vlaneseq
        %v109 = vand.u32 %v108, 127
        %vm110 = vcmp.lt.s32.totalorder %v109, 8
        %v111 = vlaneseq
        %v112 = vshrl.u32 %v111, 7
        %vm114 = vcmp.eq.s32.totalorder %v112, %v109
        %v115 = vld [vmem:[%s99] sm:$0xff]
        %v116 = vsel %vm114, %v115, 0.0
        %117 = vadd.xlane.f32.xlu0 %v116
        %v118 = vpop.xlane.xlu0 %117
        %vm119 = vcmp.ge.s32.totalorder %v112, %v109
        %vm120 = vmand %vm119, %vm110
        %v121 = vsel %vm120, %v115, 0.0
        %v122 = vrcp.pop %v118
        %v123 = vmul.f32 %v121, %v122
        %124 = vst [vmem:[#allocation2] sm:$0xff] %v123
        %v125 = vlaneseq
        %v126 = vand.u32 %v125, 127
        %v127 = vlaneseq
        %v128 = vshrl.u32 %v127, 7
        %vm130 = vcmp.eq.s32.totalorder %v126, %v128
        %v131 = vlaneseq
        %v132 = vand.u32 %v131, 127
        %vm133 = vcmp.eq.s32.totalorder %v132, 0
        %v134 = vsel %vm133, 1.0, -1.0
        %v135 = vsel %vm130, %v134, 0.0
        %s136 = scalar_lea.vmem [#allocation2], 1
        %v137 = vld [vmem:[%s136] ss:$0 sm:$0xff]
        %v138 = vxor.u32 %v137, 2147483648
        %v139 = vlaneseq
        %v140 = vand.u32 %v139, 127
        %vm141 = vcmp.eq.s32.totalorder %v140, 1
        %v142 = vmul.f32 %v138, %v135
        %143 = vadd.xlane.f32.xlu0 %v142
        %v144 = vpop.xlane.xlu0 %143
        %v145 = vsel %vm141, %v144, %v135
        %s146 = scalar_lea.vmem [#allocation2], 2
        %v147 = vld [vmem:[%s146] ss:$0 sm:$0xff]
        %v148 = vxor.u32 %v147, 2147483648
        %v149 = vlaneseq
        %v150 = vand.u32 %v149, 127
        %vm151 = vcmp.eq.s32.totalorder %v150, 2
        %v152 = vmul.f32 %v148, %v145
        %153 = vadd.xlane.f32.xlu0 %v152
        %v154 = vpop.xlane.xlu0 %153
        %v155 = vsel %vm151, %v154, %v145
        %s156 = scalar_lea.vmem [#allocation2], 3
        %v157 = vld [vmem:[%s156] ss:$0 sm:$0xff]
        %v158 = vxor.u32 %v157, 2147483648
        %v159 = vlaneseq
        %v160 = vand.u32 %v159, 127
        %vm161 = vcmp.eq.s32.totalorder %v160, 3
        %v162 = vmul.f32 %v158, %v155
        %163 = vadd.xlane.f32.xlu0 %v162
        %v164 = vpop.xlane.xlu0 %163
        %v165 = vsel %vm161, %v164, %v155
        %s166 = scalar_lea.vmem [#allocation2], 4
        %v167 = vld [vmem:[%s166] ss:$0 sm:$0xff]
        %v168 = vxor.u32 %v167, 2147483648
        %v169 = vlaneseq
        %v170 = vand.u32 %v169, 127
        %vm171 = vcmp.eq.s32.totalorder %v170, 4
        %v172 = vmul.f32 %v168, %v165
        %173 = vadd.xlane.f32.xlu0 %v172
        %v174 = vpop.xlane.xlu0 %173
        %v175 = vsel %vm171, %v174, %v165
        %s176 = scalar_lea.vmem [#allocation2], 5
        %v177 = vld [vmem:[%s176] ss:$0 sm:$0xff]
        %v178 = vxor.u32 %v177, 2147483648
        %v179 = vlaneseq
        %v180 = vand.u32 %v179, 127
        %vm181 = vcmp.eq.s32.totalorder %v180, 5
        %v182 = vmul.f32 %v178, %v175
        %183 = vadd.xlane.f32.xlu0 %v182
        %v184 = vpop.xlane.xlu0 %183
        %v185 = vsel %vm181, %v184, %v175
        %s186 = scalar_lea.vmem [#allocation2], 6
        %v187 = vld [vmem:[%s186] ss:$0 sm:$0xff]
        %v188 = vxor.u32 %v187, 2147483648
        %v189 = vlaneseq
        %v190 = vand.u32 %v189, 127
        %vm191 = vcmp.eq.s32.totalorder %v190, 6
        %v192 = vmul.f32 %v188, %v185
        %193 = vadd.xlane.f32.xlu0 %v192
        %v194 = vpop.xlane.xlu0 %193
        %v195 = vsel %vm191, %v194, %v185
        %s196 = scalar_lea.vmem [#allocation2], 7
        %v197 = vld [vmem:[%s196] ss:$0 sm:$0xff]
        %v198 = vxor.u32 %v197, 2147483648
        %v199 = vlaneseq
        %v200 = vand.u32 %v199, 127
        %vm201 = vcmp.eq.s32.totalorder %v200, 7
        %v202 = vmul.f32 %v198, %v195
        %203 = vadd.xlane.f32.xlu0 %v202
        %v204 = vpop.xlane.xlu0 %203
        %v205 = vsel %vm201, %v204, %v195
        %v206 = vrcp.pop %v118
        %v207 = vmul.f32 %v205, %v206
        %vm208 = vweird.f32 %v118
        %v209 = vsel %vm208, %v205, %v207
        %210 = vst [vmem:[%s107] sm:$0xff] %v209
        %s211 = sand.u32 %s8, 1
        %s212 = sand.u32 %s8, 1
        %s213 = smul.addr %s212, 8
        %s214 = scalar_lea.vmem [#allocation1], %s213
        %s215 = sadd.s32 %s17, %s16
        %s216 = sadd.s32 %s215, %s15
        %s217 = sadd.s32 %s216, %s14
        %s218 = smul.addr %s217, 8
        %s219 = scalar_lea.vmem %s1, %s218
        // Predicated region
        $region55: #{custom-call.13} parent=53 // pred_check
          _
        $region56: #{custom-call.13} parent=53 // pred_check_branch
          %221 = sbr.rel (0) target = $region58
        $region57: #{custom-call.13} parent=53 // pred_region
          // Predicated region
          $region59: #{custom-call.13} parent=57 // pred_check
            _
          $region60: #{custom-call.13} parent=57 // pred_check_branch
            %223 = sbr.rel (0) target = $region62
          $region61: #{custom-call.13} parent=57 // pred_region
            // Predicated region
            $region74: #{custom-call.13} parent=61 // pred_check
              _
            $region75: #{custom-call.13} parent=61 // pred_check_branch
              %238 = sbr.rel (0) target = $region77
            $region76: #{custom-call.13} parent=61 // pred_region
              loop: start=0, step=1, limit=1
              $region78: #{custom-call.13} parent=76 // loop_pre_header
                _
              $region79: #{custom-call.13} parent=76 // loop_header
                %s240 = sphi 0, %s244
                %p241 = scmp.ge.s32.totalorder %s240, 1
                %s245 = sphi %s214, %s214
                %s246 = sphi %s219, %s219
              $region80: #{custom-call.13} parent=76 // loop_header_branch
                %243 = sbr.rel (%p241) target = $region84
              $region81: #{custom-call.13} parent=76 // loop_body
                %v247 = vld [vmem:[%s245] sm:$0xff]
                %248 = vst [vmem:[%s246] sm:$0xff] %v247
              $region82: #{custom-call.13} parent=76 // loop_footer
                %s244 = sadd.s32 1, %s240
              $region83: #{custom-call.13} parent=76 // loop_footer_branch
                %239 = sbr.rel target = $region79
              $region84: #{custom-call.13} parent=76 // loop_exit
                _
            $region77: #{custom-call.13} parent=61 // pred_fallthru
              _
            // Predicated region
            $region85: #{custom-call.13} parent=61 // pred_check
              _
            $region86: #{custom-call.13} parent=61 // pred_check_branch
              %250 = sbr.rel target = $region88
            $region87: #{custom-call.13} parent=61 // pred_region
              _
            $region88: #{custom-call.13} parent=61 // pred_fallthru
              _
          $region62: #{custom-call.13} parent=57 // pred_fallthru
            _
          // Predicated region
          $region63: #{custom-call.13} parent=57 // pred_check
            _
          $region64: #{custom-call.13} parent=57 // pred_check_branch
            %225 = sbr.rel target = $region66
          $region65: #{custom-call.13} parent=57 // pred_region
            loop: start=0, step=1, limit=1
            $region67: #{custom-call.13} parent=65 // loop_pre_header
              _
            $region68: #{custom-call.13} parent=65 // loop_header
              %s228 = sphi 0, %s232
              %p229 = scmp.ge.s32.totalorder %s228, 1
              %s233 = sphi %s214, %s214
              %s234 = sphi %s219, %s219
            $region69: #{custom-call.13} parent=65 // loop_header_branch
              %231 = sbr.rel (%p229) target = $region73
            $region70: #{custom-call.13} parent=65 // loop_body
              %v235 = vld [vmem:[%s233] sm:$0xff]
              %236 = vst [vmem:[%s234] sm:$0xff] %v235
            $region71: #{custom-call.13} parent=65 // loop_footer
              %s232 = sadd.s32 1, %s228
            $region72: #{custom-call.13} parent=65 // loop_footer_branch
              %227 = sbr.rel target = $region68
            $region73: #{custom-call.13} parent=65 // loop_exit
              _
          $region66: #{custom-call.13} parent=57 // pred_fallthru
            _
        $region58: #{custom-call.13} parent=53 // pred_fallthru
          _
        %251 = vnop
      $region54: #{custom-call.13} parent=5 // pred_fallthru
        _
      %p252 = scmp.le.s32.totalorder 2, %s3
      // Predicated region
      $region89: #{custom-call.13} parent=5 // pred_check
        %p253 = pneg %p252
      $region90: #{custom-call.13} parent=5 // pred_check_branch
        %255 = sbr.rel (%p253) target = $region92
      $region91: #{custom-call.13} parent=5 // pred_region
        %s256 = ssub.s32 %s3, 2
        %s257 = sand.u32 %s9, 1
        %s258 = sand.u32 %s9, 1
        %s259 = smul.addr %s258, 8
        %s260 = scalar_lea.vmem [#allocation1], %s259
      $region92: #{custom-call.13} parent=5 // pred_fallthru
        _
    $region6: #{custom-call.13} parent=1 // loop_footer
      %s7 = sadd.s32 1, %s3
    $region7: #{custom-call.13} parent=1 // loop_footer_branch
      %2 = sbr.rel target = $region3
    $region8: #{custom-call.13} parent=1 // loop_exit
      _

// kernel: reason_block.2
$region0: #{reason_block.2}
  #allocation0 [shape = 'u32[]', space=smem, size = 0x4, offset = 0x4, fixed_abs, tag = 'smem constant byte address 0x4 - core index']
  #allocation1 [shape = 'u32[144,128]{1,0:T(1,128)}', space=vmem, size = 0x12000, scoped, tag = 'internal scratch']
  #allocation2 [shape = 'f32[1,1]{1,0:T(1,128)S(1)}', space=vmem, size = 0x200, scoped, tag = 'scoped memory for reason_block.2']
  %s0 = inlined_call_operand.vmem [shape: bf16[2,8,32], index: 0, kind: input, shape index: {}]
  %s1 = inlined_call_operand.vmem [shape: bf16[32,32], index: 1, kind: input, shape index: {}]
  %s2 = inlined_call_operand.vmem [shape: f32[1,32], index: 2, kind: input, shape index: {}]
  %s3 = inlined_call_operand.vmem [shape: bf16[32,32], index: 3, kind: input, shape index: {}]
  %s4 = inlined_call_operand.vmem [shape: f32[1,32], index: 4, kind: input, shape index: {}]
  %s5 = inlined_call_operand.vmem [shape: bf16[32,32], index: 5, kind: input, shape index: {}]
  %s6 = inlined_call_operand.vmem [shape: bf16[32,1], index: 6, kind: input, shape index: {}]
  %s7 = inlined_call_operand.<no memory space> [shape: f32[1,1], index: 7, kind: input, shape index: {}]
  %s8 = inlined_call_operand.vmem [shape: f32[2,8,8], index: 8, kind: output, shape index: {0}]
  %s9 = inlined_call_operand.vmem [shape: f32[2,8,8], index: 9, kind: output, shape index: {1}]
  %10 = xla_tuple %s8, %s9
  %s11 = sld [smem:[#allocation0]]
  $region50: #{reason_block.2} parent=0
    _
  %s13 = ssub.s32 1, %s11
  %s14 = scalar_select 0, %s13, %s11
  %v15 = vstv %s7
  %16 = vst [vmem:[#allocation2] sm:$0x1] %v15
  // Predicated region
  $region2: #{reason_block.2} parent=0 // pred_check
    _
  $region3: #{reason_block.2} parent=0 // pred_check_branch
    %18 = sbr.rel (0) target = $region5
  $region4: #{reason_block.2} parent=0 // pred_region
    _
  $region5: #{reason_block.2} parent=0 // pred_fallthru
    _
  // Predicated region
  $region6: #{reason_block.2} parent=0 // pred_check
    _
  $region7: #{reason_block.2} parent=0 // pred_check_branch
    %20 = sbr.rel (0) target = $region9
  $region8: #{reason_block.2} parent=0 // pred_region
    _
  $region9: #{reason_block.2} parent=0 // pred_fallthru
    _
  // Predicated region
  $region10: #{reason_block.2} parent=0 // pred_check
    _
  $region11: #{reason_block.2} parent=0 // pred_check_branch
    %22 = sbr.rel (0) target = $region13
  $region12: #{reason_block.2} parent=0 // pred_region
    _
  $region13: #{reason_block.2} parent=0 // pred_fallthru
    _
  // Predicated region
  $region14: #{reason_block.2} parent=0 // pred_check
    _
  $region15: #{reason_block.2} parent=0 // pred_check_branch
    %24 = sbr.rel (0) target = $region17
  $region16: #{reason_block.2} parent=0 // pred_region
    _
  $region17: #{reason_block.2} parent=0 // pred_fallthru
    _
  // Predicated region
  $region18: #{reason_block.2} parent=0 // pred_check
    _
  $region19: #{reason_block.2} parent=0 // pred_check_branch
    %26 = sbr.rel (0) target = $region21
  $region20: #{reason_block.2} parent=0 // pred_region
    _
  $region21: #{reason_block.2} parent=0 // pred_fallthru
    _
  // Predicated region
  $region22: #{reason_block.2} parent=0 // pred_check
    _
  $region23: #{reason_block.2} parent=0 // pred_check_branch
    %28 = sbr.rel (0) target = $region25
  $region24: #{reason_block.2} parent=0 // pred_region
    _
  $region25: #{reason_block.2} parent=0 // pred_fallthru
    _
  // Predicated region
  $region26: #{reason_block.2} parent=0 // pred_check
    _
  $region27: #{reason_block.2} parent=0 // pred_check_branch
    %30 = sbr.rel (0) target = $region29
  $region28: #{reason_block.2} parent=0 // pred_region
    _
  $region29: #{reason_block.2} parent=0 // pred_fallthru
    _
  // Predicated region
  $region30: #{reason_block.2} parent=0 // pred_check
    _
  $region31: #{reason_block.2} parent=0 // pred_check_branch
    %32 = sbr.rel (0) target = $region33
  $region32: #{reason_block.2} parent=0 // pred_region
    _
  $region33: #{reason_block.2} parent=0 // pred_fallthru
    _
  %v34 = vld [vmem:[%s0] sm:$0xf]
  %v35 = vld [vmem:[%s0 + $0x4] sm:$0xf]
  %v36 = vld [vmem:[%s1] sm:$0xf]
  %v37 = vld [vmem:[%s1 + $0x4] sm:$0xf]
  %v38 = vld [vmem:[%s1 + $0x8] sm:$0xf]
  %v39 = vld [vmem:[%s1 + $0xc] sm:$0xf]
  %v40 = vld [vmem:[%s2] sm:$0x1]
  %v42 = vlaneseq
  %v43 = vshrl.u32 %v42, 7
  %v44 = vsub.s32 0, %v43
  %v45 = vrot.slane %v40, %v44
  %v49 = vunpack.c.l.b16 %v34
  %v50 = vunpack.c.l.b16 %v35
  %v51 = vpack.c.b16 %v50, %v49
  %v56 = vunpack.c.l.b16 %v36
  %v57 = vunpack.c.l.b16 %v37
  %v58 = vunpack.c.l.b16 %v38
  %v59 = vunpack.c.l.b16 %v39
  %v60 = vpack.c.b16 %v57, %v56
  %v61 = vpack.c.b16 %v59, %v58
  %vm64 = vcmask 261120
  %v66 = vsel %vm64, %v51, 0
  %68 = vmatprep.subr.bf16.mxu0 0
  %69 = vmatpush1.bf16.msra.mxu0 %v60
  %70 = vmatprep.subr.bf16.mxu0 0
  %71 = vmatpush1.bf16.msra.mxu0 %v61
  %72 = vmatprep.subr.bf16.mxu0 0
  %73 = vmatpush1.bf16.msra.mxu0 0
  %74 = vmatprep.subr.bf16.mxu0 0
  %75 = vmatpush1.bf16.msra.mxu0 0
  %76 = vmatprep.subr.bf16.mxu0 0
  %77 = vmatpush1.bf16.msra.mxu0 0
  %78 = vmatprep.subr.bf16.mxu0 0
  %79 = vmatpush1.bf16.msra.mxu0 0
  %80 = vmatprep.subr.bf16.mxu0 0
  %81 = vmatpush1.bf16.msra.mxu0 0
  %82 = vmatprep.subr.bf16.mxu0 0
  %83 = vmatpush1.bf16.msra.mxu0 0
  %84 = vmatprep.subr.bf16.mxu0 0
  %85 = vmatpush1.bf16.msra.mxu0 0
  %86 = vmatprep.subr.bf16.mxu0 0
  %87 = vmatpush1.bf16.msra.mxu0 0
  %88 = vmatprep.subr.bf16.mxu0 0
  %89 = vmatpush1.bf16.msra.mxu0 0
  %90 = vmatprep.subr.bf16.mxu0 0
  %91 = vmatpush1.bf16.msra.mxu0 0
  %92 = vmatprep.subr.bf16.mxu0 0
  %93 = vmatpush1.bf16.msra.mxu0 0
  %94 = vmatprep.subr.bf16.mxu0 0
  %95 = vmatpush1.bf16.msra.mxu0 0
  %96 = vmatprep.subr.bf16.mxu0 0
  %97 = vmatpush1.bf16.msra.mxu0 0
  %98 = vmatprep.subr.bf16.mxu0 0
  %99 = vmatpush1.bf16.msra.mxu0 0
  %100 = vmatprep.mubr.bf16.mxu0 0
  %101 = vmatmul.mubr.bf16.gmra.mrb[0].mxu0 %v66
  %v102 = vpop.f32.mrb[0].mxu0
  %v103 = vadd.f32 %v45, %v102
  %v104 = vpop.f32.mrb[0].mxu0
  %v105 = vpop.f32.mrb[0].mxu0
  %v106 = vadd.f32 %v45, %v105
  %v107 = vpop.f32.mrb[0].mxu0
  %108 = vdwg.mxu0
  %v109 = vtanh.pop %v103
  %v110 = vtanh.pop %v106
  %v111 = vld [vmem:[%s3] sm:$0xf]
  %v112 = vld [vmem:[%s3 + $0x4] sm:$0xf]
  %v113 = vld [vmem:[%s3 + $0x8] sm:$0xf]
  %v114 = vld [vmem:[%s3 + $0xc] sm:$0xf]
  %v115 = vld [vmem:[%s4] sm:$0x1]
  %v117 = vlaneseq
  %v118 = vshrl.u32 %v117, 7
  %v119 = vsub.s32 0, %v118
  %v120 = vrot.slane %v115, %v119
  %v126 = vunpack.c.l.b16 %v111
  %v127 = vunpack.c.l.b16 %v112
  %v128 = vunpack.c.l.b16 %v113
  %v129 = vunpack.c.l.b16 %v114
  %v130 = vpack.c.b16 %v127, %v126
  %v131 = vpack.c.b16 %v129, %v128
  %134 = vmatprep.subr.bf16.mxu0 0
  %135 = vmatpush1.bf16.msra.mxu0 %v130
  %136 = vmatprep.subr.bf16.mxu0 0
  %137 = vmatpush1.bf16.msra.mxu0 %v131
  %138 = vmatprep.subr.bf16.mxu0 0
  %139 = vmatpush1.bf16.msra.mxu0 0
  %140 = vmatprep.subr.bf16.mxu0 0
  %141 = vmatpush1.bf16.msra.mxu0 0
  %142 = vmatprep.subr.bf16.mxu0 0
  %143 = vmatpush1.bf16.msra.mxu0 0
  %144 = vmatprep.subr.bf16.mxu0 0
  %145 = vmatpush1.bf16.msra.mxu0 0
  %146 = vmatprep.subr.bf16.mxu0 0
  %147 = vmatpush1.bf16.msra.mxu0 0
  %148 = vmatprep.subr.bf16.mxu0 0
  %149 = vmatpush1.bf16.msra.mxu0 0
  %150 = vmatprep.subr.bf16.mxu0 0
  %151 = vmatpush1.bf16.msra.mxu0 0
  %152 = vmatprep.subr.bf16.mxu0 0
  %153 = vmatpush1.bf16.msra.mxu0 0
  %154 = vmatprep.subr.bf16.mxu0 0
  %155 = vmatpush1.bf16.msra.mxu0 0
  %156 = vmatprep.subr.bf16.mxu0 0
  %157 = vmatpush1.bf16.msra.mxu0 0
  %158 = vmatprep.subr.bf16.mxu0 0
  %159 = vmatpush1.bf16.msra.mxu0 0
  %160 = vmatprep.subr.bf16.mxu0 0
  %161 = vmatpush1.bf16.msra.mxu0 0
  %162 = vmatprep.subr.bf16.mxu0 0
  %163 = vmatpush1.bf16.msra.mxu0 0
  %164 = vmatprep.subr.bf16.mxu0 0
  %165 = vmatpush1.bf16.msra.mxu0 0
  %166 = vmatprep.mubr.bf16.mxu0 0
  %167 = vmatmul.mubr.bf16.gmra.mrb[0].mxu0 %v66
  %v168 = vpop.f32.mrb[0].mxu0
  %v169 = vadd.f32 %v120, %v168
  %v170 = vpop.f32.mrb[0].mxu0
  %v171 = vpop.f32.mrb[0].mxu0
  %v172 = vadd.f32 %v120, %v171
  %v173 = vpop.f32.mrb[0].mxu0
  %174 = vdwg.mxu0
  %v175 = vtanh.pop %v169
  %v176 = vtanh.pop %v172
  %v177 = vpack.c.bf16 %v110, %v109
  %v178 = vld [vmem:[%s5] sm:$0xf]
  %v179 = vld [vmem:[%s5 + $0x4] sm:$0xf]
  %v180 = vld [vmem:[%s5 + $0x8] sm:$0xf]
  %v181 = vld [vmem:[%s5 + $0xc] sm:$0xf]
  %v186 = vunpack.c.l.b16 %v178
  %v187 = vunpack.c.l.b16 %v179
  %v188 = vunpack.c.l.b16 %v180
  %v189 = vunpack.c.l.b16 %v181
  %v190 = vpack.c.b16 %v187, %v186
  %v191 = vpack.c.b16 %v189, %v188
  %v195 = vsel %vm64, %v177, 0
  %197 = vmatprep.subr.bf16.mxu0 0
  %198 = vmatpush1.bf16.msra.mxu0 %v190
  %199 = vmatprep.subr.bf16.mxu0 0
  %200 = vmatpush1.bf16.msra.mxu0 %v191
  %201 = vmatprep.subr.bf16.mxu0 0
  %202 = vmatpush1.bf16.msra.mxu0 0
  %203 = vmatprep.subr.bf16.mxu0 0
  %204 = vmatpush1.bf16.msra.mxu0 0
  %205 = vmatprep.subr.bf16.mxu0 0
  %206 = vmatpush1.bf16.msra.mxu0 0
  %207 = vmatprep.subr.bf16.mxu0 0
  %208 = vmatpush1.bf16.msra.mxu0 0
  %209 = vmatprep.subr.bf16.mxu0 0
  %210 = vmatpush1.bf16.msra.mxu0 0
  %211 = vmatprep.subr.bf16.mxu0 0
  %212 = vmatpush1.bf16.msra.mxu0 0
  %213 = vmatprep.subr.bf16.mxu0 0
  %214 = vmatpush1.bf16.msra.mxu0 0
  %215 = vmatprep.subr.bf16.mxu0 0
  %216 = vmatpush1.bf16.msra.mxu0 0
  %217 = vmatprep.subr.bf16.mxu0 0
  %218 = vmatpush1.bf16.msra.mxu0 0
  %219 = vmatprep.subr.bf16.mxu0 0
  %220 = vmatpush1.bf16.msra.mxu0 0
  %221 = vmatprep.subr.bf16.mxu0 0
  %222 = vmatpush1.bf16.msra.mxu0 0
  %223 = vmatprep.subr.bf16.mxu0 0
  %224 = vmatpush1.bf16.msra.mxu0 0
  %225 = vmatprep.subr.bf16.mxu0 0
  %226 = vmatpush1.bf16.msra.mxu0 0
  %227 = vmatprep.subr.bf16.mxu0 0
  %228 = vmatpush1.bf16.msra.mxu0 0
  %229 = vmatprep.mubr.bf16.mxu0 0
  %230 = vmatmul.mubr.bf16.gmra.mrb[0].mxu0 %v195
  %v231 = vpop.f32.mrb[0].mxu0
  %v232 = vadd.f32 0.0, %v231
  %v233 = vpop.f32.mrb[0].mxu0
  %v234 = vpop.f32.mrb[0].mxu0
  %v235 = vadd.f32 0.0, %v234
  %v236 = vpop.f32.mrb[0].mxu0
  %237 = vdwg.mxu0
  %v239 = vsel %vm64, %v232, 0
  %v242 = vsel %vm64, %v175, 0
  %244 = vmatprep.subr.mxu0 0.0
  %245 = vmatpush1.xpose.msra.mxu0 %v242
  %246 = vmatprep.subr.mxu0 0.0
  %247 = vmatpush1.xpose.msra.mxu0 0.0
  %248 = vmatprep.subr.mxu0 0.0
  %249 = vmatpush1.xpose.msra.mxu0 0.0
  %250 = vmatprep.subr.mxu0 0.0
  %251 = vmatpush1.xpose.msra.mxu0 0.0
  %252 = vmatprep.subr.mxu0 0.0
  %253 = vmatpush1.xpose.msra.mxu0 0.0
  %254 = vmatprep.subr.mxu0 0.0
  %255 = vmatpush1.xpose.msra.mxu0 0.0
  %256 = vmatprep.subr.mxu0 0.0
  %257 = vmatpush1.xpose.msra.mxu0 0.0
  %258 = vmatprep.subr.mxu0 0.0
  %259 = vmatpush1.xpose.msra.mxu0 0.0
  %260 = vmatprep.subr.mxu0 0.0
  %261 = vmatpush1.xpose.msra.mxu0 0.0
  %262 = vmatprep.subr.mxu0 0.0
  %263 = vmatpush1.xpose.msra.mxu0 0.0
  %264 = vmatprep.subr.mxu0 0.0
  %265 = vmatpush1.xpose.msra.mxu0 0.0
  %266 = vmatprep.subr.mxu0 0.0
  %267 = vmatpush1.xpose.msra.mxu0 0.0
  %268 = vmatprep.subr.mxu0 0.0
  %269 = vmatpush1.xpose.msra.mxu0 0.0
  %270 = vmatprep.subr.mxu0 0.0
  %271 = vmatpush1.xpose.msra.mxu0 0.0
  %272 = vmatprep.subr.mxu0 0.0
  %273 = vmatpush1.xpose.msra.mxu0 0.0
  %274 = vmatprep.subr.mxu0 0.0
  %275 = vmatpush1.xpose.msra.mxu0 0.0
  %276 = vmatprep.subr.mxu0 0.0
  %277 = vmatpush1.xpose.msra.mxu0 0.0
  %278 = vmatprep.subr.mxu0 0.0
  %279 = vmatpush1.xpose.msra.mxu0 0.0
  %280 = vmatprep.subr.mxu0 0.0
  %281 = vmatpush1.xpose.msra.mxu0 0.0
  %282 = vmatprep.subr.mxu0 0.0
  %283 = vmatpush1.xpose.msra.mxu0 0.0
  %284 = vmatprep.subr.mxu0 0.0
  %285 = vmatpush1.xpose.msra.mxu0 0.0
  %286 = vmatprep.subr.mxu0 0.0
  %287 = vmatpush1.xpose.msra.mxu0 0.0
  %288 = vmatprep.subr.mxu0 0.0
  %289 = vmatpush1.xpose.msra.mxu0 0.0
  %290 = vmatprep.subr.mxu0 0.0
  %291 = vmatpush1.xpose.msra.mxu0 0.0
  %292 = vmatprep.subr.mxu0 0.0
  %293 = vmatpush1.xpose.msra.mxu0 0.0
  %294 = vmatprep.subr.mxu0 0.0
  %295 = vmatpush1.xpose.msra.mxu0 0.0
  %296 = vmatprep.subr.mxu0 0.0
  %297 = vmatpush1.xpose.msra.mxu0 0.0
  %298 = vmatprep.subr.mxu0 0.0
  %299 = vmatpush1.xpose.msra.mxu0 0.0
  %300 = vmatprep.subr.mxu0 0.0
  %301 = vmatpush1.xpose.msra.mxu0 0.0
  %302 = vmatprep.subr.mxu0 0.0
  %303 = vmatpush1.xpose.msra.mxu0 0.0
  %304 = vmatprep.subr.mxu0 0.0
  %305 = vmatpush1.xpose.msra.mxu0 0.0
  %306 = vmatprep.subr.mxu0 0.0
  %307 = vmatpush1.xpose.msra.mxu0 0.0
  %308 = vmatprep.mubr.f32.mxu0 0.0
  %309 = vmatmul.mubr.f32.gmra.mrb[0].mxu0 %v239
  %v310 = vpop.f32.mrb[0].mxu0
  %v311 = vadd.f32 0.0, %v310
  %v312 = vpop.f32.mrb[0].mxu0
  %313 = vdwg.mxu0
  %v315 = vsel %vm64, %v235, 0
  %v318 = vsel %vm64, %v176, 0
  %320 = vmatprep.subr.mxu0 0.0
  %321 = vmatpush1.xpose.msra.mxu0 %v318
  %322 = vmatprep.subr.mxu0 0.0
  %323 = vmatpush1.xpose.msra.mxu0 0.0
  %324 = vmatprep.subr.mxu0 0.0
  %325 = vmatpush1.xpose.msra.mxu0 0.0
  %326 = vmatprep.subr.mxu0 0.0
  %327 = vmatpush1.xpose.msra.mxu0 0.0
  %328 = vmatprep.subr.mxu0 0.0
  %329 = vmatpush1.xpose.msra.mxu0 0.0
  %330 = vmatprep.subr.mxu0 0.0
  %331 = vmatpush1.xpose.msra.mxu0 0.0
  %332 = vmatprep.subr.mxu0 0.0
  %333 = vmatpush1.xpose.msra.mxu0 0.0
  %334 = vmatprep.subr.mxu0 0.0
  %335 = vmatpush1.xpose.msra.mxu0 0.0
  %336 = vmatprep.subr.mxu0 0.0
  %337 = vmatpush1.xpose.msra.mxu0 0.0
  %338 = vmatprep.subr.mxu0 0.0
  %339 = vmatpush1.xpose.msra.mxu0 0.0
  %340 = vmatprep.subr.mxu0 0.0
  %341 = vmatpush1.xpose.msra.mxu0 0.0
  %342 = vmatprep.subr.mxu0 0.0
  %343 = vmatpush1.xpose.msra.mxu0 0.0
  %344 = vmatprep.subr.mxu0 0.0
  %345 = vmatpush1.xpose.msra.mxu0 0.0
  %346 = vmatprep.subr.mxu0 0.0
  %347 = vmatpush1.xpose.msra.mxu0 0.0
  %348 = vmatprep.subr.mxu0 0.0
  %349 = vmatpush1.xpose.msra.mxu0 0.0
  %350 = vmatprep.subr.mxu0 0.0
  %351 = vmatpush1.xpose.msra.mxu0 0.0
  %352 = vmatprep.subr.mxu0 0.0
  %353 = vmatpush1.xpose.msra.mxu0 0.0
  %354 = vmatprep.subr.mxu0 0.0
  %355 = vmatpush1.xpose.msra.mxu0 0.0
  %356 = vmatprep.subr.mxu0 0.0
  %357 = vmatpush1.xpose.msra.mxu0 0.0
  %358 = vmatprep.subr.mxu0 0.0
  %359 = vmatpush1.xpose.msra.mxu0 0.0
  %360 = vmatprep.subr.mxu0 0.0
  %361 = vmatpush1.xpose.msra.mxu0 0.0
  %362 = vmatprep.subr.mxu0 0.0
  %363 = vmatpush1.xpose.msra.mxu0 0.0
  %364 = vmatprep.subr.mxu0 0.0
  %365 = vmatpush1.xpose.msra.mxu0 0.0
  %366 = vmatprep.subr.mxu0 0.0
  %367 = vmatpush1.xpose.msra.mxu0 0.0
  %368 = vmatprep.subr.mxu0 0.0
  %369 = vmatpush1.xpose.msra.mxu0 0.0
  %370 = vmatprep.subr.mxu0 0.0
  %371 = vmatpush1.xpose.msra.mxu0 0.0
  %372 = vmatprep.subr.mxu0 0.0
  %373 = vmatpush1.xpose.msra.mxu0 0.0
  %374 = vmatprep.subr.mxu0 0.0
  %375 = vmatpush1.xpose.msra.mxu0 0.0
  %376 = vmatprep.subr.mxu0 0.0
  %377 = vmatpush1.xpose.msra.mxu0 0.0
  %378 = vmatprep.subr.mxu0 0.0
  %379 = vmatpush1.xpose.msra.mxu0 0.0
  %380 = vmatprep.subr.mxu0 0.0
  %381 = vmatpush1.xpose.msra.mxu0 0.0
  %382 = vmatprep.subr.mxu0 0.0
  %383 = vmatpush1.xpose.msra.mxu0 0.0
  %384 = vmatprep.mubr.f32.mxu0 0.0
  %385 = vmatmul.mubr.f32.gmra.mrb[0].mxu0 %v315
  %v386 = vpop.f32.mrb[0].mxu0
  %v387 = vadd.f32 0.0, %v386
  %v388 = vpop.f32.mrb[0].mxu0
  %389 = vdwg.mxu0
  %v390 = vld [vmem:[%s6] sm:$0xf]
  %v391 = vld [vmem:[%s6 + $0x4] sm:$0xf]
  %v392 = vld [vmem:[%s6 + $0x8] sm:$0xf]
  %v393 = vld [vmem:[%s6 + $0xc] sm:$0xf]
  %v394 = vld [vmem:[#allocation2] sm:$0x1]
  %v396 = vlaneseq
  %v397 = vshrl.u32 %v396, 7
  %v398 = vsub.s32 0, %v397
  %v399 = vrot.slane %v394, %v398
  %v401 = vpack.c.b16 %v49, %v49
  %v402 = vpack.c.b16 %v50, %v50
  %v403 = vunpack.c.l.b16 %v401
  %v404 = vunpack.c.l.b16 %v402
  %v405 = vrot.slane %v404, 7
  %vm406 = vcmask 1041409
  %v407 = vsel %vm406, %v405, %v403
  %v408 = vpack.c.b16 %v407, %v407
  %v413 = vunpack.c.l.b16 %v390
  %v414 = vunpack.c.l.b16 %v391
  %v415 = vunpack.c.l.b16 %v392
  %v416 = vunpack.c.l.b16 %v393
  %v417 = vpack.c.b16 %v414, %v413
  %v418 = vpack.c.b16 %v416, %v415
  %v422 = vsel %vm64, %v408, 0
  %424 = vmatprep.subr.bf16.mxu0 0
  %425 = vmatpush1.bf16.msra.mxu0 %v417
  %426 = vmatprep.subr.bf16.mxu0 0
  %427 = vmatpush1.bf16.msra.mxu0 %v418
  %428 = vmatprep.subr.bf16.mxu0 0
  %429 = vmatpush1.bf16.msra.mxu0 0
  %430 = vmatprep.subr.bf16.mxu0 0
  %431 = vmatpush1.bf16.msra.mxu0 0
  %432 = vmatprep.subr.bf16.mxu0 0
  %433 = vmatpush1.bf16.msra.mxu0 0
  %434 = vmatprep.subr.bf16.mxu0 0
  %435 = vmatpush1.bf16.msra.mxu0 0
  %436 = vmatprep.subr.bf16.mxu0 0
  %437 = vmatpush1.bf16.msra.mxu0 0
  %438 = vmatprep.subr.bf16.mxu0 0
  %439 = vmatpush1.bf16.msra.mxu0 0
  %440 = vmatprep.subr.bf16.mxu0 0
  %441 = vmatpush1.bf16.msra.mxu0 0
  %442 = vmatprep.subr.bf16.mxu0 0
  %443 = vmatpush1.bf16.msra.mxu0 0
  %444 = vmatprep.subr.bf16.mxu0 0
  %445 = vmatpush1.bf16.msra.mxu0 0
  %446 = vmatprep.subr.bf16.mxu0 0
  %447 = vmatpush1.bf16.msra.mxu0 0
  %448 = vmatprep.subr.bf16.mxu0 0
  %449 = vmatpush1.bf16.msra.mxu0 0
  %450 = vmatprep.subr.bf16.mxu0 0
  %451 = vmatpush1.bf16.msra.mxu0 0
  %452 = vmatprep.subr.bf16.mxu0 0
  %453 = vmatpush1.bf16.msra.mxu0 0
  %454 = vmatprep.subr.bf16.mxu0 0
  %455 = vmatpush1.bf16.msra.mxu0 0
  %456 = vmatprep.mubr.bf16.mxu0 0
  %457 = vmatmul.mubr.bf16.gmra.mrb[0].mxu0 %v422
  %v458 = vpop.f32.mrb[0].mxu0
  %v459 = vadd.f32 %v399, %v458
  %v460 = vpop.f32.mrb[0].mxu0
  %v461 = vpop.f32.mrb[0].mxu0
  %v462 = vpop.f32.mrb[0].mxu0
  %463 = vdwg.mxu0
  %v464 = vmul.f32 %v459, 1.442695
  %v465 = vpow.pop %v464
  %v466 = vlaneseq
  %v467 = vshrl.u32 %v466, 7
  %v468 = vlaneseq
  %v469 = vand.u32 %v468, 127
  %vm470 = vcmp.eq.s32.totalorder %v467, %v469
  %v471 = vmul.f32 %v311, 1.442695
  %v472 = vpow.pop %v471
  %v473 = vmul.f32 %v387, 1.442695
  %v474 = vpow.pop %v473
  %v475 = vsel %vm470, 0.0, %v472
  %v476 = vsel %vm470, 0.0, %v474
  %vm477 = vcmask 64512
  %v478 = vsel %vm477, %v475, 0.0
  %v479 = vrot.slane %v478, 4
  %v480 = vadd.f32 %v478, %v479
  %v481 = vrot.slane %v480, 2
  %v482 = vadd.f32 %v480, %v481
  %v483 = vrot.slane %v482, 1
  %v484 = vadd.f32 %v482, %v483
  %v485 = vsel %vm477, %v476, 0.0
  %v486 = vrot.slane %v485, 4
  %v487 = vadd.f32 %v485, %v486
  %v488 = vrot.slane %v487, 2
  %v489 = vadd.f32 %v487, %v488
  %v490 = vrot.slane %v489, 1
  %v491 = vadd.f32 %v489, %v490
  %v492 = vsub.f32 0.0, %v475
  %v493 = vsub.f32 0.0, %v476
  %v494 = vsel %vm470, %v484, %v492
  %v495 = vsel %vm470, %v491, %v493
  %496 = vst.msk [vmem:[%s8] sm:$0xff] %vm477, %v475
  %497 = vst.msk [vmem:[%s8 + $0x8] sm:$0xff] %vm477, %v476
  %498 = vst.msk [vmem:[%s9] sm:$0xff] %vm477, %v494
  %499 = vst.msk [vmem:[%s9 + $0x8] sm:$0xff] %vm477, %v495
  %v502 = vunpack.c.l.s4 1966171168
  %v503 = vunpack.c.0.s8 %v502
  %v504 = vlaneseq
  %v505 = vshrl.u32 %v504, 7
  %v506 = vsub.s32 %v503, %v505
  %v507 = vrot.slane %v465, %v506
  %v508 = vcombine.high %v507, %v507
  %v510 = vunpack.c.l.s4 1966171168
  %v511 = vunpack.c.0.s8 %v510
  %v512 = vlaneseq
  %v513 = vshrl.u32 %v512, 7
  %v514 = vsub.s32 %v511, %v513
  %v515 = vrot.slane %v507, %v514
  %v517 = vunpack.c.l.s4 1966171168
  %v518 = vunpack.c.0.s8 %v517
  %v519 = vlaneseq
  %v520 = vshrl.u32 %v519, 7
  %v521 = vsub.s32 %v518, %v520
  %v522 = vrot.slane %v508, %v521
  %523 = vset.pattern.permute.xlu0 0
  %524 = vperm.xlu0 %523, %v515
  %v525 = vpop.permute.xlu0 %524
  %v527 = vlaneseq
  %v528 = vshrl.u32 %v527, 7
  %v529 = vsub.s32 0, %v528
  %v530 = vrot.slane %v525, %v529
  %531 = vset.pattern.permute.xlu0 0
  %532 = vperm.xlu0 %531, %v522
  %v533 = vpop.permute.xlu0 %532
  %v535 = vlaneseq
  %v536 = vshrl.u32 %v535, 7
  %v537 = vsub.s32 0, %v536
  %v538 = vrot.slane %v533, %v537
  %vm539 = vcmask 57344
  %540 = vst.msk [vmem:[%s9] sm:$0x1] %vm539, %v530
  %541 = vst.msk [vmem:[%s9 + $0x8] sm:$0x1] %vm539, %v538
  // Predicated region
  $region34: #{reason_block.2} parent=0 // pred_check
    _
  $region35: #{reason_block.2} parent=0 // pred_check_branch
    %543 = sbr.rel (0) target = $region37
  $region36: #{reason_block.2} parent=0 // pred_region
    _
  $region37: #{reason_block.2} parent=0 // pred_fallthru
    _
  // Predicated region
  $region38: #{reason_block.2} parent=0 // pred_check
    _
  $region39: #{reason_block.2} parent=0 // pred_check_branch
    %545 = sbr.rel (0) target = $region41
  $region40: #{reason_block.2} parent=0 // pred_region
    _
  $region41: #{reason_block.2} parent=0 // pred_fallthru
    _
  // Predicated region
  $region42: #{reason_block.2} parent=0 // pred_check
    _
  $region43: #{reason_block.2} parent=0 // pred_check_branch
    %547 = sbr.rel (0) target = $region45
  $region44: #{reason_block.2} parent=0 // pred_region
    _
  $region45: #{reason_block.2} parent=0 // pred_fallthru
    _
  // Predicated region
  $region46: #{reason_block.2} parent=0 // pred_check
    _
  $region47: #{reason_block.2} parent=0 // pred_check_branch
    %549 = sbr.rel (0) target = $region49
  $region48: #{reason_block.2} parent=0 // pred_region
    _
  $region49: #{reason_block.2} parent=0 // pred_fallthru
    _

// kernel: reason_block.3
$region0: #{reason_block.3}
  #allocation0 [shape = 'u32[]', space=smem, size = 0x4, offset = 0x4, fixed_abs, tag = 'smem constant byte address 0x4 - core index']
  #allocation1 [shape = 'u32[144,128]{1,0:T(1,128)}', space=vmem, size = 0x12000, scoped, tag = 'internal scratch']
  %s0 = inlined_call_operand.vmem [shape: f32[2,8,8], index: 0, kind: input, shape index: {}]
  %s1 = inlined_call_operand.vmem [shape: f32[2,8,8], index: 1, kind: input, shape index: {}]
  %s2 = inlined_call_operand.vmem [shape: bf16[2,8,32], index: 2, kind: input, shape index: {}]
  %s3 = inlined_call_operand.vmem [shape: bf16[32,32], index: 3, kind: input, shape index: {}]
  %s4 = inlined_call_operand.vmem [shape: f32[1,32], index: 4, kind: input, shape index: {}]
  %s5 = inlined_call_operand.vmem [shape: bf16[64,32], index: 5, kind: input, shape index: {}]
  %s6 = inlined_call_operand.vmem [shape: f32[1,32], index: 6, kind: input, shape index: {}]
  %s7 = inlined_call_operand.vmem [shape: bf16[96,32], index: 7, kind: input, shape index: {}]
  %s8 = inlined_call_operand.vmem [shape: f32[1,32], index: 8, kind: input, shape index: {}]
  %s9 = inlined_call_operand.hbm [shape: f32[2,8,128], index: 9, kind: output, shape index: {}]
  %s10 = sld [smem:[#allocation0]]
  $region46: #{reason_block.3} parent=0
    _
  %s12 = ssub.s32 1, %s10
  %s13 = scalar_select 0, %s12, %s10
  $region1: #{reason_block.3} parent=0
    #allocation2 [shape = 'u8[8192]{0}', space=vmem, size = 0x2000, scoped, tag = 'output window, operand 0, single buffered']
    #allocation3 [shape = 's32[1]{0}', space=sflag, size = 0x4, scoped, tag = 'scoped memory for reason_block.3']
    %14 = vsyncpa [#allocation3], 0
    // Predicated region
    $region2: #{reason_block.3} parent=1 // pred_check
      _
    $region3: #{reason_block.3} parent=1 // pred_check_branch
      %16 = sbr.rel (0) target = $region5
    $region4: #{reason_block.3} parent=1 // pred_region
      _
    $region5: #{reason_block.3} parent=1 // pred_fallthru
      _
    // Predicated region
    $region6: #{reason_block.3} parent=1 // pred_check
      _
    $region7: #{reason_block.3} parent=1 // pred_check_branch
      %18 = sbr.rel (0) target = $region9
    $region8: #{reason_block.3} parent=1 // pred_region
      _
    $region9: #{reason_block.3} parent=1 // pred_fallthru
      _
    // Predicated region
    $region10: #{reason_block.3} parent=1 // pred_check
      _
    $region11: #{reason_block.3} parent=1 // pred_check_branch
      %20 = sbr.rel (0) target = $region13
    $region12: #{reason_block.3} parent=1 // pred_region
      _
    $region13: #{reason_block.3} parent=1 // pred_fallthru
      _
    // Predicated region
    $region14: #{reason_block.3} parent=1 // pred_check
      _
    $region15: #{reason_block.3} parent=1 // pred_check_branch
      %22 = sbr.rel (0) target = $region17
    $region16: #{reason_block.3} parent=1 // pred_region
      _
    $region17: #{reason_block.3} parent=1 // pred_fallthru
      _
    // Predicated region
    $region18: #{reason_block.3} parent=1 // pred_check
      _
    $region19: #{reason_block.3} parent=1 // pred_check_branch
      %24 = sbr.rel (0) target = $region21
    $region20: #{reason_block.3} parent=1 // pred_region
      _
    $region21: #{reason_block.3} parent=1 // pred_fallthru
      _
    // Predicated region
    $region22: #{reason_block.3} parent=1 // pred_check
      _
    $region23: #{reason_block.3} parent=1 // pred_check_branch
      %26 = sbr.rel (0) target = $region25
    $region24: #{reason_block.3} parent=1 // pred_region
      _
    $region25: #{reason_block.3} parent=1 // pred_fallthru
      _
    // Predicated region
    $region26: #{reason_block.3} parent=1 // pred_check
      _
    $region27: #{reason_block.3} parent=1 // pred_check_branch
      %28 = sbr.rel (0) target = $region29
    $region28: #{reason_block.3} parent=1 // pred_region
      _
    $region29: #{reason_block.3} parent=1 // pred_fallthru
      _
    // Predicated region
    $region30: #{reason_block.3} parent=1 // pred_check
      _
    $region31: #{reason_block.3} parent=1 // pred_check_branch
      %30 = sbr.rel (0) target = $region33
    $region32: #{reason_block.3} parent=1 // pred_region
      _
    $region33: #{reason_block.3} parent=1 // pred_fallthru
      _
    // Predicated region
    $region34: #{reason_block.3} parent=1 // pred_check
      _
    $region35: #{reason_block.3} parent=1 // pred_check_branch
      %32 = sbr.rel (0) target = $region37
    $region36: #{reason_block.3} parent=1 // pred_region
      _
    $region37: #{reason_block.3} parent=1 // pred_fallthru
      _
    %v34 = vld [vmem:[%s0] sm:$0xff]
    %v35 = vld [vmem:[%s0 + $0x8] sm:$0xff]
    %v36 = vld [vmem:[%s1] sm:$0xff]
    %v37 = vld [vmem:[%s1 + $0x8] sm:$0xff]
    %vm38 = vcmask 64512
    %v40 = vsel %vm38, %v34, 0
    %42 = vmatprep.subr.mxu0 0.0
    %43 = vmatpush1.msra.mxu0 %v36
    %44 = vmatprep.subr.mxu0 0.0
    %45 = vmatpush1.msra.mxu0 0.0
    %46 = vmatprep.subr.mxu0 0.0
    %47 = vmatpush1.msra.mxu0 0.0
    %48 = vmatprep.subr.mxu0 0.0
    %49 = vmatpush1.msra.mxu0 0.0
    %50 = vmatprep.subr.mxu0 0.0
    %51 = vmatpush1.msra.mxu0 0.0
    %52 = vmatprep.subr.mxu0 0.0
    %53 = vmatpush1.msra.mxu0 0.0
    %54 = vmatprep.subr.mxu0 0.0
    %55 = vmatpush1.msra.mxu0 0.0
    %56 = vmatprep.subr.mxu0 0.0
    %57 = vmatpush1.msra.mxu0 0.0
    %58 = vmatprep.subr.mxu0 0.0
    %59 = vmatpush1.msra.mxu0 0.0
    %60 = vmatprep.subr.mxu0 0.0
    %61 = vmatpush1.msra.mxu0 0.0
    %62 = vmatprep.subr.mxu0 0.0
    %63 = vmatpush1.msra.mxu0 0.0
    %64 = vmatprep.subr.mxu0 0.0
    %65 = vmatpush1.msra.mxu0 0.0
    %66 = vmatprep.subr.mxu0 0.0
    %67 = vmatpush1.msra.mxu0 0.0
    %68 = vmatprep.subr.mxu0 0.0
    %69 = vmatpush1.msra.mxu0 0.0
    %70 = vmatprep.subr.mxu0 0.0
    %71 = vmatpush1.msra.mxu0 0.0
    %72 = vmatprep.subr.mxu0 0.0
    %73 = vmatpush1.msra.mxu0 0.0
    %74 = vmatprep.subr.mxu0 0.0
    %75 = vmatpush1.msra.mxu0 0.0
    %76 = vmatprep.subr.mxu0 0.0
    %77 = vmatpush1.msra.mxu0 0.0
    %78 = vmatprep.subr.mxu0 0.0
    %79 = vmatpush1.msra.mxu0 0.0
    %80 = vmatprep.subr.mxu0 0.0
    %81 = vmatpush1.msra.mxu0 0.0
    %82 = vmatprep.subr.mxu0 0.0
    %83 = vmatpush1.msra.mxu0 0.0
    %84 = vmatprep.subr.mxu0 0.0
    %85 = vmatpush1.msra.mxu0 0.0
    %86 = vmatprep.subr.mxu0 0.0
    %87 = vmatpush1.msra.mxu0 0.0
    %88 = vmatprep.subr.mxu0 0.0
    %89 = vmatpush1.msra.mxu0 0.0
    %90 = vmatprep.subr.mxu0 0.0
    %91 = vmatpush1.msra.mxu0 0.0
    %92 = vmatprep.subr.mxu0 0.0
    %93 = vmatpush1.msra.mxu0 0.0
    %94 = vmatprep.subr.mxu0 0.0
    %95 = vmatpush1.msra.mxu0 0.0
    %96 = vmatprep.subr.mxu0 0.0
    %97 = vmatpush1.msra.mxu0 0.0
    %98 = vmatprep.subr.mxu0 0.0
    %99 = vmatpush1.msra.mxu0 0.0
    %100 = vmatprep.subr.mxu0 0.0
    %101 = vmatpush1.msra.mxu0 0.0
    %102 = vmatprep.subr.mxu0 0.0
    %103 = vmatpush1.msra.mxu0 0.0
    %104 = vmatprep.subr.mxu0 0.0
    %105 = vmatpush1.msra.mxu0 0.0
    %106 = vmatprep.mubr.f32.mxu0 0.0
    %107 = vmatmul.mubr.f32.gmra.mrb[0].mxu0 %v40
    %v108 = vpop.f32.mrb[0].mxu0
    %v109 = vadd.f32 0.0, %v108
    %v110 = vpop.f32.mrb[0].mxu0
    %111 = vdwg.mxu0
    %v113 = vsel %vm38, %v35, 0
    %115 = vmatprep.subr.mxu0 0.0
    %116 = vmatpush1.msra.mxu0 %v37
    %117 = vmatprep.subr.mxu0 0.0
    %118 = vmatpush1.msra.mxu0 0.0
    %119 = vmatprep.subr.mxu0 0.0
    %120 = vmatpush1.msra.mxu0 0.0
    %121 = vmatprep.subr.mxu0 0.0
    %122 = vmatpush1.msra.mxu0 0.0
    %123 = vmatprep.subr.mxu0 0.0
    %124 = vmatpush1.msra.mxu0 0.0
    %125 = vmatprep.subr.mxu0 0.0
    %126 = vmatpush1.msra.mxu0 0.0
    %127 = vmatprep.subr.mxu0 0.0
    %128 = vmatpush1.msra.mxu0 0.0
    %129 = vmatprep.subr.mxu0 0.0
    %130 = vmatpush1.msra.mxu0 0.0
    %131 = vmatprep.subr.mxu0 0.0
    %132 = vmatpush1.msra.mxu0 0.0
    %133 = vmatprep.subr.mxu0 0.0
    %134 = vmatpush1.msra.mxu0 0.0
    %135 = vmatprep.subr.mxu0 0.0
    %136 = vmatpush1.msra.mxu0 0.0
    %137 = vmatprep.subr.mxu0 0.0
    %138 = vmatpush1.msra.mxu0 0.0
    %139 = vmatprep.subr.mxu0 0.0
    %140 = vmatpush1.msra.mxu0 0.0
    %141 = vmatprep.subr.mxu0 0.0
    %142 = vmatpush1.msra.mxu0 0.0
    %143 = vmatprep.subr.mxu0 0.0
    %144 = vmatpush1.msra.mxu0 0.0
    %145 = vmatprep.subr.mxu0 0.0
    %146 = vmatpush1.msra.mxu0 0.0
    %147 = vmatprep.subr.mxu0 0.0
    %148 = vmatpush1.msra.mxu0 0.0
    %149 = vmatprep.subr.mxu0 0.0
    %150 = vmatpush1.msra.mxu0 0.0
    %151 = vmatprep.subr.mxu0 0.0
    %152 = vmatpush1.msra.mxu0 0.0
    %153 = vmatprep.subr.mxu0 0.0
    %154 = vmatpush1.msra.mxu0 0.0
    %155 = vmatprep.subr.mxu0 0.0
    %156 = vmatpush1.msra.mxu0 0.0
    %157 = vmatprep.subr.mxu0 0.0
    %158 = vmatpush1.msra.mxu0 0.0
    %159 = vmatprep.subr.mxu0 0.0
    %160 = vmatpush1.msra.mxu0 0.0
    %161 = vmatprep.subr.mxu0 0.0
    %162 = vmatpush1.msra.mxu0 0.0
    %163 = vmatprep.subr.mxu0 0.0
    %164 = vmatpush1.msra.mxu0 0.0
    %165 = vmatprep.subr.mxu0 0.0
    %166 = vmatpush1.msra.mxu0 0.0
    %167 = vmatprep.subr.mxu0 0.0
    %168 = vmatpush1.msra.mxu0 0.0
    %169 = vmatprep.subr.mxu0 0.0
    %170 = vmatpush1.msra.mxu0 0.0
    %171 = vmatprep.subr.mxu0 0.0
    %172 = vmatpush1.msra.mxu0 0.0
    %173 = vmatprep.subr.mxu0 0.0
    %174 = vmatpush1.msra.mxu0 0.0
    %175 = vmatprep.subr.mxu0 0.0
    %176 = vmatpush1.msra.mxu0 0.0
    %177 = vmatprep.subr.mxu0 0.0
    %178 = vmatpush1.msra.mxu0 0.0
    %179 = vmatprep.mubr.f32.mxu0 0.0
    %180 = vmatmul.mubr.f32.gmra.mrb[0].mxu0 %v113
    %v181 = vpop.f32.mrb[0].mxu0
    %v182 = vadd.f32 0.0, %v181
    %v183 = vpop.f32.mrb[0].mxu0
    %184 = vdwg.mxu0
    %v186 = vsel %vm38, %v36, 0
    %188 = vmatprep.subr.mxu0 0.0
    %189 = vmatpush1.xpose.msra.mxu0 %v186
    %190 = vmatprep.subr.mxu0 0.0
    %191 = vmatpush1.xpose.msra.mxu0 0.0
    %192 = vmatprep.subr.mxu0 0.0
    %193 = vmatpush1.xpose.msra.mxu0 0.0
    %194 = vmatprep.subr.mxu0 0.0
    %195 = vmatpush1.xpose.msra.mxu0 0.0
    %196 = vmatprep.subr.mxu0 0.0
    %197 = vmatpush1.xpose.msra.mxu0 0.0
    %198 = vmatprep.subr.mxu0 0.0
    %199 = vmatpush1.xpose.msra.mxu0 0.0
    %200 = vmatprep.subr.mxu0 0.0
    %201 = vmatpush1.xpose.msra.mxu0 0.0
    %202 = vmatprep.subr.mxu0 0.0
    %203 = vmatpush1.xpose.msra.mxu0 0.0
    %204 = vmatprep.subr.mxu0 0.0
    %205 = vmatpush1.xpose.msra.mxu0 0.0
    %206 = vmatprep.subr.mxu0 0.0
    %207 = vmatpush1.xpose.msra.mxu0 0.0
    %208 = vmatprep.subr.mxu0 0.0
    %209 = vmatpush1.xpose.msra.mxu0 0.0
    %210 = vmatprep.subr.mxu0 0.0
    %211 = vmatpush1.xpose.msra.mxu0 0.0
    %212 = vmatprep.subr.mxu0 0.0
    %213 = vmatpush1.xpose.msra.mxu0 0.0
    %214 = vmatprep.subr.mxu0 0.0
    %215 = vmatpush1.xpose.msra.mxu0 0.0
    %216 = vmatprep.subr.mxu0 0.0
    %217 = vmatpush1.xpose.msra.mxu0 0.0
    %218 = vmatprep.subr.mxu0 0.0
    %219 = vmatpush1.xpose.msra.mxu0 0.0
    %220 = vmatprep.subr.mxu0 0.0
    %221 = vmatpush1.xpose.msra.mxu0 0.0
    %222 = vmatprep.subr.mxu0 0.0
    %223 = vmatpush1.xpose.msra.mxu0 0.0
    %224 = vmatprep.subr.mxu0 0.0
    %225 = vmatpush1.xpose.msra.mxu0 0.0
    %226 = vmatprep.subr.mxu0 0.0
    %227 = vmatpush1.xpose.msra.mxu0 0.0
    %228 = vmatprep.subr.mxu0 0.0
    %229 = vmatpush1.xpose.msra.mxu0 0.0
    %230 = vmatprep.subr.mxu0 0.0
    %231 = vmatpush1.xpose.msra.mxu0 0.0
    %232 = vmatprep.subr.mxu0 0.0
    %233 = vmatpush1.xpose.msra.mxu0 0.0
    %234 = vmatprep.subr.mxu0 0.0
    %235 = vmatpush1.xpose.msra.mxu0 0.0
    %236 = vmatprep.subr.mxu0 0.0
    %237 = vmatpush1.xpose.msra.mxu0 0.0
    %238 = vmatprep.subr.mxu0 0.0
    %239 = vmatpush1.xpose.msra.mxu0 0.0
    %240 = vmatprep.subr.mxu0 0.0
    %241 = vmatpush1.xpose.msra.mxu0 0.0
    %242 = vmatprep.subr.mxu0 0.0
    %243 = vmatpush1.xpose.msra.mxu0 0.0
    %244 = vmatprep.subr.mxu0 0.0
    %245 = vmatpush1.xpose.msra.mxu0 0.0
    %246 = vmatprep.subr.mxu0 0.0
    %247 = vmatpush1.xpose.msra.mxu0 0.0
    %248 = vmatprep.subr.mxu0 0.0
    %249 = vmatpush1.xpose.msra.mxu0 0.0
    %250 = vmatprep.subr.mxu0 0.0
    %251 = vmatpush1.xpose.msra.mxu0 0.0
    %252 = vmatprep.mubr.f32.mxu0 0.0
    %253 = vmatmul.mubr.f32.gmra.mrb[0].mxu0 %v40
    %v254 = vpop.f32.mrb[0].mxu0
    %v255 = vadd.f32 0.0, %v254
    %v256 = vpop.f32.mrb[0].mxu0
    %257 = vdwg.mxu0
    %v259 = vsel %vm38, %v37, 0
    %261 = vmatprep.subr.mxu0 0.0
    %262 = vmatpush1.xpose.msra.mxu0 %v259
    %263 = vmatprep.subr.mxu0 0.0
    %264 = vmatpush1.xpose.msra.mxu0 0.0
    %265 = vmatprep.subr.mxu0 0.0
    %266 = vmatpush1.xpose.msra.mxu0 0.0
    %267 = vmatprep.subr.mxu0 0.0
    %268 = vmatpush1.xpose.msra.mxu0 0.0
    %269 = vmatprep.subr.mxu0 0.0
    %270 = vmatpush1.xpose.msra.mxu0 0.0
    %271 = vmatprep.subr.mxu0 0.0
    %272 = vmatpush1.xpose.msra.mxu0 0.0
    %273 = vmatprep.subr.mxu0 0.0
    %274 = vmatpush1.xpose.msra.mxu0 0.0
    %275 = vmatprep.subr.mxu0 0.0
    %276 = vmatpush1.xpose.msra.mxu0 0.0
    %277 = vmatprep.subr.mxu0 0.0
    %278 = vmatpush1.xpose.msra.mxu0 0.0
    %279 = vmatprep.subr.mxu0 0.0
    %280 = vmatpush1.xpose.msra.mxu0 0.0
    %281 = vmatprep.subr.mxu0 0.0
    %282 = vmatpush1.xpose.msra.mxu0 0.0
    %283 = vmatprep.subr.mxu0 0.0
    %284 = vmatpush1.xpose.msra.mxu0 0.0
    %285 = vmatprep.subr.mxu0 0.0
    %286 = vmatpush1.xpose.msra.mxu0 0.0
    %287 = vmatprep.subr.mxu0 0.0
    %288 = vmatpush1.xpose.msra.mxu0 0.0
    %289 = vmatprep.subr.mxu0 0.0
    %290 = vmatpush1.xpose.msra.mxu0 0.0
    %291 = vmatprep.subr.mxu0 0.0
    %292 = vmatpush1.xpose.msra.mxu0 0.0
    %293 = vmatprep.subr.mxu0 0.0
    %294 = vmatpush1.xpose.msra.mxu0 0.0
    %295 = vmatprep.subr.mxu0 0.0
    %296 = vmatpush1.xpose.msra.mxu0 0.0
    %297 = vmatprep.subr.mxu0 0.0
    %298 = vmatpush1.xpose.msra.mxu0 0.0
    %299 = vmatprep.subr.mxu0 0.0
    %300 = vmatpush1.xpose.msra.mxu0 0.0
    %301 = vmatprep.subr.mxu0 0.0
    %302 = vmatpush1.xpose.msra.mxu0 0.0
    %303 = vmatprep.subr.mxu0 0.0
    %304 = vmatpush1.xpose.msra.mxu0 0.0
    %305 = vmatprep.subr.mxu0 0.0
    %306 = vmatpush1.xpose.msra.mxu0 0.0
    %307 = vmatprep.subr.mxu0 0.0
    %308 = vmatpush1.xpose.msra.mxu0 0.0
    %309 = vmatprep.subr.mxu0 0.0
    %310 = vmatpush1.xpose.msra.mxu0 0.0
    %311 = vmatprep.subr.mxu0 0.0
    %312 = vmatpush1.xpose.msra.mxu0 0.0
    %313 = vmatprep.subr.mxu0 0.0
    %314 = vmatpush1.xpose.msra.mxu0 0.0
    %315 = vmatprep.subr.mxu0 0.0
    %316 = vmatpush1.xpose.msra.mxu0 0.0
    %317 = vmatprep.subr.mxu0 0.0
    %318 = vmatpush1.xpose.msra.mxu0 0.0
    %319 = vmatprep.subr.mxu0 0.0
    %320 = vmatpush1.xpose.msra.mxu0 0.0
    %321 = vmatprep.subr.mxu0 0.0
    %322 = vmatpush1.xpose.msra.mxu0 0.0
    %323 = vmatprep.subr.mxu0 0.0
    %324 = vmatpush1.xpose.msra.mxu0 0.0
    %325 = vmatprep.mubr.f32.mxu0 0.0
    %326 = vmatmul.mubr.f32.gmra.mrb[0].mxu0 %v113
    %v327 = vpop.f32.mrb[0].mxu0
    %v328 = vadd.f32 0.0, %v327
    %v329 = vpop.f32.mrb[0].mxu0
    %330 = vdwg.mxu0
    %v331 = vlaneseq
    %v332 = vshrl.u32 %v331, 7
    %v333 = vlaneseq
    %v334 = vand.u32 %v333, 127
    %vm335 = vcmp.ne.s32.totalorder %v334, 0
    %v336 = vsel %vm335, %v109, 0.0
    %v337 = vsel %vm335, %v182, 0.0
    %vm338 = vcmp.ne.s32.totalorder %v332, 0
    %v339 = vsel %vm338, %v255, 0.0
    %v340 = vsel %vm338, %v328, 0.0
    %v341 = vsub.f32 %v336, %v339
    %v342 = vsub.f32 %v337, %v340
    %v343 = vld [vmem:[%s2] sm:$0xf]
    %v344 = vld [vmem:[%s2 + $0x4] sm:$0xf]
    %v345 = vld [vmem:[%s3] sm:$0xf]
    %v346 = vld [vmem:[%s3 + $0x4] sm:$0xf]
    %v347 = vld [vmem:[%s3 + $0x8] sm:$0xf]
    %v348 = vld [vmem:[%s3 + $0xc] sm:$0xf]
    %v349 = vld [vmem:[%s4] sm:$0x1]
    %v351 = vlaneseq
    %v352 = vshrl.u32 %v351, 7
    %v353 = vsub.s32 0, %v352
    %v354 = vrot.slane %v349, %v353
    %v358 = vunpack.c.l.b16 %v343
    %v359 = vunpack.c.l.b16 %v344
    %v360 = vpack.c.b16 %v359, %v358
    %v365 = vunpack.c.l.b16 %v345
    %v366 = vunpack.c.l.b16 %v346
    %v367 = vunpack.c.l.b16 %v347
    %v368 = vunpack.c.l.b16 %v348
    %v369 = vpack.c.b16 %v366, %v365
    %v370 = vpack.c.b16 %v368, %v367
    %vm373 = vcmask 261120
    %v375 = vsel %vm373, %v360, 0
    %377 = vmatprep.subr.bf16.mxu0 0
    %378 = vmatpush1.bf16.msra.mxu0 %v369
    %379 = vmatprep.subr.bf16.mxu0 0
    %380 = vmatpush1.bf16.msra.mxu0 %v370
    %381 = vmatprep.subr.bf16.mxu0 0
    %382 = vmatpush1.bf16.msra.mxu0 0
    %383 = vmatprep.subr.bf16.mxu0 0
    %384 = vmatpush1.bf16.msra.mxu0 0
    %385 = vmatprep.subr.bf16.mxu0 0
    %386 = vmatpush1.bf16.msra.mxu0 0
    %387 = vmatprep.subr.bf16.mxu0 0
    %388 = vmatpush1.bf16.msra.mxu0 0
    %389 = vmatprep.subr.bf16.mxu0 0
    %390 = vmatpush1.bf16.msra.mxu0 0
    %391 = vmatprep.subr.bf16.mxu0 0
    %392 = vmatpush1.bf16.msra.mxu0 0
    %393 = vmatprep.subr.bf16.mxu0 0
    %394 = vmatpush1.bf16.msra.mxu0 0
    %395 = vmatprep.subr.bf16.mxu0 0
    %396 = vmatpush1.bf16.msra.mxu0 0
    %397 = vmatprep.subr.bf16.mxu0 0
    %398 = vmatpush1.bf16.msra.mxu0 0
    %399 = vmatprep.subr.bf16.mxu0 0
    %400 = vmatpush1.bf16.msra.mxu0 0
    %401 = vmatprep.subr.bf16.mxu0 0
    %402 = vmatpush1.bf16.msra.mxu0 0
    %403 = vmatprep.subr.bf16.mxu0 0
    %404 = vmatpush1.bf16.msra.mxu0 0
    %405 = vmatprep.subr.bf16.mxu0 0
    %406 = vmatpush1.bf16.msra.mxu0 0
    %407 = vmatprep.subr.bf16.mxu0 0
    %408 = vmatpush1.bf16.msra.mxu0 0
    %409 = vmatprep.mubr.bf16.mxu0 0
    %410 = vmatmul.mubr.bf16.gmra.mrb[0].mxu0 %v375
    %v411 = vpop.f32.mrb[0].mxu0
    %v412 = vadd.f32 %v354, %v411
    %v413 = vpop.f32.mrb[0].mxu0
    %v414 = vpop.f32.mrb[0].mxu0
    %v415 = vadd.f32 %v354, %v414
    %v416 = vpop.f32.mrb[0].mxu0
    %417 = vdwg.mxu0
    %v419 = vsel %vm38, %v341, 0
    %421 = vmatprep.subr.mxu0 0.0
    %422 = vmatpush1.msra.mxu0 %v412
    %423 = vmatprep.subr.mxu0 0.0
    %424 = vmatpush1.msra.mxu0 0.0
    %425 = vmatprep.subr.mxu0 0.0
    %426 = vmatpush1.msra.mxu0 0.0
    %427 = vmatprep.subr.mxu0 0.0
    %428 = vmatpush1.msra.mxu0 0.0
    %429 = vmatprep.subr.mxu0 0.0
    %430 = vmatpush1.msra.mxu0 0.0
    %431 = vmatprep.subr.mxu0 0.0
    %432 = vmatpush1.msra.mxu0 0.0
    %433 = vmatprep.subr.mxu0 0.0
    %434 = vmatpush1.msra.mxu0 0.0
    %435 = vmatprep.subr.mxu0 0.0
    %436 = vmatpush1.msra.mxu0 0.0
    %437 = vmatprep.subr.mxu0 0.0
    %438 = vmatpush1.msra.mxu0 0.0
    %439 = vmatprep.subr.mxu0 0.0
    %440 = vmatpush1.msra.mxu0 0.0
    %441 = vmatprep.subr.mxu0 0.0
    %442 = vmatpush1.msra.mxu0 0.0
    %443 = vmatprep.subr.mxu0 0.0
    %444 = vmatpush1.msra.mxu0 0.0
    %445 = vmatprep.subr.mxu0 0.0
    %446 = vmatpush1.msra.mxu0 0.0
    %447 = vmatprep.subr.mxu0 0.0
    %448 = vmatpush1.msra.mxu0 0.0
    %449 = vmatprep.subr.mxu0 0.0
    %450 = vmatpush1.msra.mxu0 0.0
    %451 = vmatprep.subr.mxu0 0.0
    %452 = vmatpush1.msra.mxu0 0.0
    %453 = vmatprep.subr.mxu0 0.0
    %454 = vmatpush1.msra.mxu0 0.0
    %455 = vmatprep.subr.mxu0 0.0
    %456 = vmatpush1.msra.mxu0 0.0
    %457 = vmatprep.subr.mxu0 0.0
    %458 = vmatpush1.msra.mxu0 0.0
    %459 = vmatprep.subr.mxu0 0.0
    %460 = vmatpush1.msra.mxu0 0.0
    %461 = vmatprep.subr.mxu0 0.0
    %462 = vmatpush1.msra.mxu0 0.0
    %463 = vmatprep.subr.mxu0 0.0
    %464 = vmatpush1.msra.mxu0 0.0
    %465 = vmatprep.subr.mxu0 0.0
    %466 = vmatpush1.msra.mxu0 0.0
    %467 = vmatprep.subr.mxu0 0.0
    %468 = vmatpush1.msra.mxu0 0.0
    %469 = vmatprep.subr.mxu0 0.0
    %470 = vmatpush1.msra.mxu0 0.0
    %471 = vmatprep.subr.mxu0 0.0
    %472 = vmatpush1.msra.mxu0 0.0
    %473 = vmatprep.subr.mxu0 0.0
    %474 = vmatpush1.msra.mxu0 0.0
    %475 = vmatprep.subr.mxu0 0.0
    %476 = vmatpush1.msra.mxu0 0.0
    %477 = vmatprep.subr.mxu0 0.0
    %478 = vmatpush1.msra.mxu0 0.0
    %479 = vmatprep.subr.mxu0 0.0
    %480 = vmatpush1.msra.mxu0 0.0
    %481 = vmatprep.subr.mxu0 0.0
    %482 = vmatpush1.msra.mxu0 0.0
    %483 = vmatprep.subr.mxu0 0.0
    %484 = vmatpush1.msra.mxu0 0.0
    %485 = vmatprep.mubr.f32.mxu0 0.0
    %486 = vmatmul.mubr.f32.gmra.mrb[0].mxu0 %v419
    %v487 = vpop.f32.mrb[0].mxu0
    %v488 = vadd.f32 0.0, %v487
    %v489 = vpop.f32.mrb[0].mxu0
    %490 = vdwg.mxu0
    %v492 = vsel %vm38, %v342, 0
    %494 = vmatprep.subr.mxu0 0.0
    %495 = vmatpush1.msra.mxu0 %v415
    %496 = vmatprep.subr.mxu0 0.0
    %497 = vmatpush1.msra.mxu0 0.0
    %498 = vmatprep.subr.mxu0 0.0
    %499 = vmatpush1.msra.mxu0 0.0
    %500 = vmatprep.subr.mxu0 0.0
    %501 = vmatpush1.msra.mxu0 0.0
    %502 = vmatprep.subr.mxu0 0.0
    %503 = vmatpush1.msra.mxu0 0.0
    %504 = vmatprep.subr.mxu0 0.0
    %505 = vmatpush1.msra.mxu0 0.0
    %506 = vmatprep.subr.mxu0 0.0
    %507 = vmatpush1.msra.mxu0 0.0
    %508 = vmatprep.subr.mxu0 0.0
    %509 = vmatpush1.msra.mxu0 0.0
    %510 = vmatprep.subr.mxu0 0.0
    %511 = vmatpush1.msra.mxu0 0.0
    %512 = vmatprep.subr.mxu0 0.0
    %513 = vmatpush1.msra.mxu0 0.0
    %514 = vmatprep.subr.mxu0 0.0
    %515 = vmatpush1.msra.mxu0 0.0
    %516 = vmatprep.subr.mxu0 0.0
    %517 = vmatpush1.msra.mxu0 0.0
    %518 = vmatprep.subr.mxu0 0.0
    %519 = vmatpush1.msra.mxu0 0.0
    %520 = vmatprep.subr.mxu0 0.0
    %521 = vmatpush1.msra.mxu0 0.0
    %522 = vmatprep.subr.mxu0 0.0
    %523 = vmatpush1.msra.mxu0 0.0
    %524 = vmatprep.subr.mxu0 0.0
    %525 = vmatpush1.msra.mxu0 0.0
    %526 = vmatprep.subr.mxu0 0.0
    %527 = vmatpush1.msra.mxu0 0.0
    %528 = vmatprep.subr.mxu0 0.0
    %529 = vmatpush1.msra.mxu0 0.0
    %530 = vmatprep.subr.mxu0 0.0
    %531 = vmatpush1.msra.mxu0 0.0
    %532 = vmatprep.subr.mxu0 0.0
    %533 = vmatpush1.msra.mxu0 0.0
    %534 = vmatprep.subr.mxu0 0.0
    %535 = vmatpush1.msra.mxu0 0.0
    %536 = vmatprep.subr.mxu0 0.0
    %537 = vmatpush1.msra.mxu0 0.0
    %538 = vmatprep.subr.mxu0 0.0
    %539 = vmatpush1.msra.mxu0 0.0
    %540 = vmatprep.subr.mxu0 0.0
    %541 = vmatpush1.msra.mxu0 0.0
    %542 = vmatprep.subr.mxu0 0.0
    %543 = vmatpush1.msra.mxu0 0.0
    %544 = vmatprep.subr.mxu0 0.0
    %545 = vmatpush1.msra.mxu0 0.0
    %546 = vmatprep.subr.mxu0 0.0
    %547 = vmatpush1.msra.mxu0 0.0
    %548 = vmatprep.subr.mxu0 0.0
    %549 = vmatpush1.msra.mxu0 0.0
    %550 = vmatprep.subr.mxu0 0.0
    %551 = vmatpush1.msra.mxu0 0.0
    %552 = vmatprep.subr.mxu0 0.0
    %553 = vmatpush1.msra.mxu0 0.0
    %554 = vmatprep.subr.mxu0 0.0
    %555 = vmatpush1.msra.mxu0 0.0
    %556 = vmatprep.subr.mxu0 0.0
    %557 = vmatpush1.msra.mxu0 0.0
    %558 = vmatprep.mubr.f32.mxu0 0.0
    %559 = vmatmul.mubr.f32.gmra.mrb[0].mxu0 %v492
    %v560 = vpop.f32.mrb[0].mxu0
    %v561 = vadd.f32 0.0, %v560
    %v562 = vpop.f32.mrb[0].mxu0
    %563 = vdwg.mxu0
    %v564 = vmax.f32 %v488, 0.0
    %v565 = vmax.f32 %v561, 0.0
    %v566 = vpack.c.bf16 %v565, %v564
    %568 = vrot.lane.b32.xlu0 %v566, 32
    %v569 = vpop.permute.xlu0 %568
    %v571 = vsel %vm373, %v360, %v569
    %v572 = vld [vmem:[%s5] sm:$0xf]
    %v573 = vld [vmem:[%s5 + $0x4] sm:$0xf]
    %v574 = vld [vmem:[%s5 + $0x8] sm:$0xf]
    %v575 = vld [vmem:[%s5 + $0xc] sm:$0xf]
    %v576 = vld [vmem:[%s5 + $0x10] sm:$0xf]
    %v577 = vld [vmem:[%s5 + $0x14] sm:$0xf]
    %v578 = vld [vmem:[%s5 + $0x18] sm:$0xf]
    %v579 = vld [vmem:[%s5 + $0x1c] sm:$0xf]
    %v580 = vld [vmem:[%s6] sm:$0x1]
    %v582 = vlaneseq
    %v583 = vshrl.u32 %v582, 7
    %v584 = vsub.s32 0, %v583
    %v585 = vrot.slane %v580, %v584
    %v595 = vunpack.c.l.b16 %v572
    %v596 = vunpack.c.l.b16 %v573
    %v597 = vunpack.c.l.b16 %v574
    %v598 = vunpack.c.l.b16 %v575
    %v599 = vunpack.c.l.b16 %v576
    %v600 = vunpack.c.l.b16 %v577
    %v601 = vunpack.c.l.b16 %v578
    %v602 = vunpack.c.l.b16 %v579
    %v603 = vpack.c.b16 %v596, %v595
    %v604 = vpack.c.b16 %v598, %v597
    %v605 = vpack.c.b16 %v600, %v599
    %v606 = vpack.c.b16 %v602, %v601
    %vm611 = vcmask 523264
    %v612 = vsel %vm611, %v571, 0
    %614 = vmatprep.subr.bf16.mxu0 0
    %615 = vmatpush1.bf16.msra.mxu0 %v603
    %616 = vmatprep.subr.bf16.mxu0 0
    %617 = vmatpush1.bf16.msra.mxu0 %v604
    %618 = vmatprep.subr.bf16.mxu0 0
    %619 = vmatpush1.bf16.msra.mxu0 %v605
    %620 = vmatprep.subr.bf16.mxu0 0
    %621 = vmatpush1.bf16.msra.mxu0 %v606
    %622 = vmatprep.subr.bf16.mxu0 0
    %623 = vmatpush1.bf16.msra.mxu0 0
    %624 = vmatprep.subr.bf16.mxu0 0
    %625 = vmatpush1.bf16.msra.mxu0 0
    %626 = vmatprep.subr.bf16.mxu0 0
    %627 = vmatpush1.bf16.msra.mxu0 0
    %628 = vmatprep.subr.bf16.mxu0 0
    %629 = vmatpush1.bf16.msra.mxu0 0
    %630 = vmatprep.subr.bf16.mxu0 0
    %631 = vmatpush1.bf16.msra.mxu0 0
    %632 = vmatprep.subr.bf16.mxu0 0
    %633 = vmatpush1.bf16.msra.mxu0 0
    %634 = vmatprep.subr.bf16.mxu0 0
    %635 = vmatpush1.bf16.msra.mxu0 0
    %636 = vmatprep.subr.bf16.mxu0 0
    %637 = vmatpush1.bf16.msra.mxu0 0
    %638 = vmatprep.subr.bf16.mxu0 0
    %639 = vmatpush1.bf16.msra.mxu0 0
    %640 = vmatprep.subr.bf16.mxu0 0
    %641 = vmatpush1.bf16.msra.mxu0 0
    %642 = vmatprep.subr.bf16.mxu0 0
    %643 = vmatpush1.bf16.msra.mxu0 0
    %644 = vmatprep.subr.bf16.mxu0 0
    %645 = vmatpush1.bf16.msra.mxu0 0
    %646 = vmatprep.mubr.bf16.mxu0 0
    %647 = vmatmul.mubr.bf16.gmra.mrb[0].mxu0 %v612
    %v648 = vpop.f32.mrb[0].mxu0
    %v649 = vadd.f32 %v585, %v648
    %v650 = vpop.f32.mrb[0].mxu0
    %v651 = vpop.f32.mrb[0].mxu0
    %v652 = vadd.f32 %v585, %v651
    %v653 = vpop.f32.mrb[0].mxu0
    %654 = vdwg.mxu0
    %655 = vmatprep.subr.mxu0 0.0
    %656 = vmatpush1.msra.mxu0 %v649
    %657 = vmatprep.subr.mxu0 0.0
    %658 = vmatpush1.msra.mxu0 0.0
    %659 = vmatprep.subr.mxu0 0.0
    %660 = vmatpush1.msra.mxu0 0.0
    %661 = vmatprep.subr.mxu0 0.0
    %662 = vmatpush1.msra.mxu0 0.0
    %663 = vmatprep.subr.mxu0 0.0
    %664 = vmatpush1.msra.mxu0 0.0
    %665 = vmatprep.subr.mxu0 0.0
    %666 = vmatpush1.msra.mxu0 0.0
    %667 = vmatprep.subr.mxu0 0.0
    %668 = vmatpush1.msra.mxu0 0.0
    %669 = vmatprep.subr.mxu0 0.0
    %670 = vmatpush1.msra.mxu0 0.0
    %671 = vmatprep.subr.mxu0 0.0
    %672 = vmatpush1.msra.mxu0 0.0
    %673 = vmatprep.subr.mxu0 0.0
    %674 = vmatpush1.msra.mxu0 0.0
    %675 = vmatprep.subr.mxu0 0.0
    %676 = vmatpush1.msra.mxu0 0.0
    %677 = vmatprep.subr.mxu0 0.0
    %678 = vmatpush1.msra.mxu0 0.0
    %679 = vmatprep.subr.mxu0 0.0
    %680 = vmatpush1.msra.mxu0 0.0
    %681 = vmatprep.subr.mxu0 0.0
    %682 = vmatpush1.msra.mxu0 0.0
    %683 = vmatprep.subr.mxu0 0.0
    %684 = vmatpush1.msra.mxu0 0.0
    %685 = vmatprep.subr.mxu0 0.0
    %686 = vmatpush1.msra.mxu0 0.0
    %687 = vmatprep.subr.mxu0 0.0
    %688 = vmatpush1.msra.mxu0 0.0
    %689 = vmatprep.subr.mxu0 0.0
    %690 = vmatpush1.msra.mxu0 0.0
    %691 = vmatprep.subr.mxu0 0.0
    %692 = vmatpush1.msra.mxu0 0.0
    %693 = vmatprep.subr.mxu0 0.0
    %694 = vmatpush1.msra.mxu0 0.0
    %695 = vmatprep.subr.mxu0 0.0
    %696 = vmatpush1.msra.mxu0 0.0
    %697 = vmatprep.subr.mxu0 0.0
    %698 = vmatpush1.msra.mxu0 0.0
    %699 = vmatprep.subr.mxu0 0.0
    %700 = vmatpush1.msra.mxu0 0.0
    %701 = vmatprep.subr.mxu0 0.0
    %702 = vmatpush1.msra.mxu0 0.0
    %703 = vmatprep.subr.mxu0 0.0
    %704 = vmatpush1.msra.mxu0 0.0
    %705 = vmatprep.subr.mxu0 0.0
    %706 = vmatpush1.msra.mxu0 0.0
    %707 = vmatprep.subr.mxu0 0.0
    %708 = vmatpush1.msra.mxu0 0.0
    %709 = vmatprep.subr.mxu0 0.0
    %710 = vmatpush1.msra.mxu0 0.0
    %711 = vmatprep.subr.mxu0 0.0
    %712 = vmatpush1.msra.mxu0 0.0
    %713 = vmatprep.subr.mxu0 0.0
    %714 = vmatpush1.msra.mxu0 0.0
    %715 = vmatprep.subr.mxu0 0.0
    %716 = vmatpush1.msra.mxu0 0.0
    %717 = vmatprep.subr.mxu0 0.0
    %718 = vmatpush1.msra.mxu0 0.0
    %719 = vmatprep.mubr.f32.mxu0 0.0
    %720 = vmatmul.mubr.f32.gmra.mrb[0].mxu0 %v419
    %v721 = vpop.f32.mrb[0].mxu0
    %v722 = vadd.f32 0.0, %v721
    %v723 = vpop.f32.mrb[0].mxu0
    %724 = vdwg.mxu0
    %725 = vmatprep.subr.mxu0 0.0
    %726 = vmatpush1.msra.mxu0 %v652
    %727 = vmatprep.subr.mxu0 0.0
    %728 = vmatpush1.msra.mxu0 0.0
    %729 = vmatprep.subr.mxu0 0.0
    %730 = vmatpush1.msra.mxu0 0.0
    %731 = vmatprep.subr.mxu0 0.0
    %732 = vmatpush1.msra.mxu0 0.0
    %733 = vmatprep.subr.mxu0 0.0
    %734 = vmatpush1.msra.mxu0 0.0
    %735 = vmatprep.subr.mxu0 0.0
    %736 = vmatpush1.msra.mxu0 0.0
    %737 = vmatprep.subr.mxu0 0.0
    %738 = vmatpush1.msra.mxu0 0.0
    %739 = vmatprep.subr.mxu0 0.0
    %740 = vmatpush1.msra.mxu0 0.0
    %741 = vmatprep.subr.mxu0 0.0
    %742 = vmatpush1.msra.mxu0 0.0
    %743 = vmatprep.subr.mxu0 0.0
    %744 = vmatpush1.msra.mxu0 0.0
    %745 = vmatprep.subr.mxu0 0.0
    %746 = vmatpush1.msra.mxu0 0.0
    %747 = vmatprep.subr.mxu0 0.0
    %748 = vmatpush1.msra.mxu0 0.0
    %749 = vmatprep.subr.mxu0 0.0
    %750 = vmatpush1.msra.mxu0 0.0
    %751 = vmatprep.subr.mxu0 0.0
    %752 = vmatpush1.msra.mxu0 0.0
    %753 = vmatprep.subr.mxu0 0.0
    %754 = vmatpush1.msra.mxu0 0.0
    %755 = vmatprep.subr.mxu0 0.0
    %756 = vmatpush1.msra.mxu0 0.0
    %757 = vmatprep.subr.mxu0 0.0
    %758 = vmatpush1.msra.mxu0 0.0
    %759 = vmatprep.subr.mxu0 0.0
    %760 = vmatpush1.msra.mxu0 0.0
    %761 = vmatprep.subr.mxu0 0.0
    %762 = vmatpush1.msra.mxu0 0.0
    %763 = vmatprep.subr.mxu0 0.0
    %764 = vmatpush1.msra.mxu0 0.0
    %765 = vmatprep.subr.mxu0 0.0
    %766 = vmatpush1.msra.mxu0 0.0
    %767 = vmatprep.subr.mxu0 0.0
    %768 = vmatpush1.msra.mxu0 0.0
    %769 = vmatprep.subr.mxu0 0.0
    %770 = vmatpush1.msra.mxu0 0.0
    %771 = vmatprep.subr.mxu0 0.0
    %772 = vmatpush1.msra.mxu0 0.0
    %773 = vmatprep.subr.mxu0 0.0
    %774 = vmatpush1.msra.mxu0 0.0
    %775 = vmatprep.subr.mxu0 0.0
    %776 = vmatpush1.msra.mxu0 0.0
    %777 = vmatprep.subr.mxu0 0.0
    %778 = vmatpush1.msra.mxu0 0.0
    %779 = vmatprep.subr.mxu0 0.0
    %780 = vmatpush1.msra.mxu0 0.0
    %781 = vmatprep.subr.mxu0 0.0
    %782 = vmatpush1.msra.mxu0 0.0
    %783 = vmatprep.subr.mxu0 0.0
    %784 = vmatpush1.msra.mxu0 0.0
    %785 = vmatprep.subr.mxu0 0.0
    %786 = vmatpush1.msra.mxu0 0.0
    %787 = vmatprep.subr.mxu0 0.0
    %788 = vmatpush1.msra.mxu0 0.0
    %789 = vmatprep.mubr.f32.mxu0 0.0
    %790 = vmatmul.mubr.f32.gmra.mrb[0].mxu0 %v492
    %v791 = vpop.f32.mrb[0].mxu0
    %v792 = vadd.f32 0.0, %v791
    %v793 = vpop.f32.mrb[0].mxu0
    %794 = vdwg.mxu0
    %v795 = vmax.f32 %v722, 0.0
    %v796 = vmax.f32 %v792, 0.0
    %v797 = vpack.c.bf16 %v796, %v795
    %799 = vrot.lane.b32.xlu0 %v797, 64
    %v800 = vpop.permute.xlu0 %799
    %v802 = vsel %vm611, %v571, %v800
    %v803 = vld [vmem:[%s7] sm:$0xf]
    %v804 = vld [vmem:[%s7 + $0x4] sm:$0xf]
    %v805 = vld [vmem:[%s7 + $0x8] sm:$0xf]
    %v806 = vld [vmem:[%s7 + $0xc] sm:$0xf]
    %v807 = vld [vmem:[%s7 + $0x10] sm:$0xf]
    %v808 = vld [vmem:[%s7 + $0x14] sm:$0xf]
    %v809 = vld [vmem:[%s7 + $0x18] sm:$0xf]
    %v810 = vld [vmem:[%s7 + $0x1c] sm:$0xf]
    %v811 = vld [vmem:[%s7 + $0x20] sm:$0xf]
    %v812 = vld [vmem:[%s7 + $0x24] sm:$0xf]
    %v813 = vld [vmem:[%s7 + $0x28] sm:$0xf]
    %v814 = vld [vmem:[%s7 + $0x2c] sm:$0xf]
    %v815 = vld [vmem:[%s8] sm:$0x1]
    %v817 = vlaneseq
    %v818 = vshrl.u32 %v817, 7
    %v819 = vsub.s32 0, %v818
    %v820 = vrot.slane %v815, %v819
    %v834 = vunpack.c.l.b16 %v803
    %v835 = vunpack.c.l.b16 %v804
    %v836 = vunpack.c.l.b16 %v805
    %v837 = vunpack.c.l.b16 %v806
    %v838 = vunpack.c.l.b16 %v807
    %v839 = vunpack.c.l.b16 %v808
    %v840 = vunpack.c.l.b16 %v809
    %v841 = vunpack.c.l.b16 %v810
    %v842 = vunpack.c.l.b16 %v811
    %v843 = vunpack.c.l.b16 %v812
    %v844 = vunpack.c.l.b16 %v813
    %v845 = vunpack.c.l.b16 %v814
    %v846 = vpack.c.b16 %v835, %v834
    %v847 = vpack.c.b16 %v837, %v836
    %v848 = vpack.c.b16 %v839, %v838
    %v849 = vpack.c.b16 %v841, %v840
    %v850 = vpack.c.b16 %v843, %v842
    %v851 = vpack.c.b16 %v845, %v844
    %vm858 = vcmask 785408
    %v859 = vsel %vm858, %v802, 0
    %861 = vmatprep.subr.bf16.mxu0 0
    %862 = vmatpush1.bf16.msra.mxu0 %v846
    %863 = vmatprep.subr.bf16.mxu0 0
    %864 = vmatpush1.bf16.msra.mxu0 %v847
    %865 = vmatprep.subr.bf16.mxu0 0
    %866 = vmatpush1.bf16.msra.mxu0 %v848
    %867 = vmatprep.subr.bf16.mxu0 0
    %868 = vmatpush1.bf16.msra.mxu0 %v849
    %869 = vmatprep.subr.bf16.mxu0 0
    %870 = vmatpush1.bf16.msra.mxu0 %v850
    %871 = vmatprep.subr.bf16.mxu0 0
    %872 = vmatpush1.bf16.msra.mxu0 %v851
    %873 = vmatprep.subr.bf16.mxu0 0
    %874 = vmatpush1.bf16.msra.mxu0 0
    %875 = vmatprep.subr.bf16.mxu0 0
    %876 = vmatpush1.bf16.msra.mxu0 0
    %877 = vmatprep.subr.bf16.mxu0 0
    %878 = vmatpush1.bf16.msra.mxu0 0
    %879 = vmatprep.subr.bf16.mxu0 0
    %880 = vmatpush1.bf16.msra.mxu0 0
    %881 = vmatprep.subr.bf16.mxu0 0
    %882 = vmatpush1.bf16.msra.mxu0 0
    %883 = vmatprep.subr.bf16.mxu0 0
    %884 = vmatpush1.bf16.msra.mxu0 0
    %885 = vmatprep.subr.bf16.mxu0 0
    %886 = vmatpush1.bf16.msra.mxu0 0
    %887 = vmatprep.subr.bf16.mxu0 0
    %888 = vmatpush1.bf16.msra.mxu0 0
    %889 = vmatprep.subr.bf16.mxu0 0
    %890 = vmatpush1.bf16.msra.mxu0 0
    %891 = vmatprep.subr.bf16.mxu0 0
    %892 = vmatpush1.bf16.msra.mxu0 0
    %893 = vmatprep.mubr.bf16.mxu0 0
    %894 = vmatmul.mubr.bf16.gmra.mrb[0].mxu0 %v859
    %v895 = vpop.f32.mrb[0].mxu0
    %v896 = vadd.f32 %v820, %v895
    %v897 = vpop.f32.mrb[0].mxu0
    %v898 = vpop.f32.mrb[0].mxu0
    %v899 = vadd.f32 %v820, %v898
    %v900 = vpop.f32.mrb[0].mxu0
    %901 = vdwg.mxu0
    %v902 = vsel %vm373, %v896, 0.0
    %v903 = vsel %vm373, %v899, 0.0
    %904 = vst [vmem:[#allocation2] sm:$0xff] %v902
    %905 = vst [vmem:[#allocation2 + $0x8] sm:$0xff] %v903
    // Predicated region
    $region38: #{reason_block.3} parent=1 // pred_check
      _
    $region39: #{reason_block.3} parent=1 // pred_check_branch
      %907 = sbr.rel (0) target = $region41
    $region40: #{reason_block.3} parent=1 // pred_region
      %s909 = ssub.s32 256, 256
      %910 = vsyncadd [#allocation3], %s909
      %s911 = sshll.u32 [#allocation2], 4
      %s912 = int_to_ptr.vmem [resolvable:$true] %s911
      %917 = dma.vmem_to_hbm [thread:$0]  %s912, 256, %s9, [#allocation3], 128, 128, 8
    $region41: #{reason_block.3} parent=1 // pred_fallthru
      _
    // Predicated region
    $region42: #{reason_block.3} parent=1 // pred_check
      _
    $region43: #{reason_block.3} parent=1 // pred_check_branch
      %919 = sbr.rel (0) target = $region45
    $region44: #{reason_block.3} parent=1 // pred_region
      %920 = dma.done [#allocation3], 256
    $region45: #{reason_block.3} parent=1 // pred_fallthru
      _
    %921 = vsyncpa [#allocation3], 1

</llo_original>
